<compile_context>
chip_gen: v7x
topology: tpu7x:2x2x1
jax: 0.10.0
libtpu: 0.0.40
codegen_flags: <defaults>
</compile_context>

<pallas_src>
import functools

import jax
import jax.numpy as jnp
from jax import lax
from jax.experimental import pallas as pl
from jax.experimental.pallas import tpu as pltpu

EPS = 1e-5


def _layernorm(x, w, b):
    mu = jnp.mean(x, axis=-1, keepdims=True)
    var = jnp.mean((x - mu) ** 2, axis=-1, keepdims=True)
    return (x - mu) * lax.rsqrt(var + EPS) * w + b


def cross_attention_kernel(
    lat_ref, ctx_ref, bias_ref,
    ln_attn_w, ln_attn_b, ln_ctx_w, ln_ctx_b,
    wq_ref, wkv_ref, wo_ref, bo_ref,
    ln_ff_w, ln_ff_b, w1_ref, b1_ref, w2_ref, b2_ref,
    out_ref,
    *, bt, n, m, heads):
    f32 = jnp.float32
    bf16 = jnp.bfloat16

    x = lat_ref[...]            # (bt*n, D)  original latents (residual source)
    ctx = ctx_ref[...]          # (bt*m, Dc)
    bias_all = bias_ref[...]    # (bt, m)    additive mask bias (0 or -FLT_MAX)

    # pre-norms (f32), then bf16 copies for the MXU
    x_norm = _layernorm(x, ln_attn_w[...], ln_attn_b[...])
    c_norm = _layernorm(ctx, ln_ctx_w[...], ln_ctx_b[...])
    xb = x_norm.astype(bf16)
    cb = c_norm.astype(bf16)

    wq3 = wq_ref[...]           # (H, D, Dh)  bf16, softmax scale pre-folded
    wkv6 = wkv_ref[...]         # (2H, Dc, Dh) bf16  [k heads | v heads]
    wo3 = wo_ref[...]           # (H, Dh, D)  bf16

    # Head-batched projections over ALL rows in the block (single MXU call each).
    x3 = jnp.broadcast_to(xb[None], (heads,) + xb.shape)          # (H, bt*n, D)
    q_all = lax.dot_general(
        x3, wq3, (((2,), (1,)), ((0,), (0,))),
        preferred_element_type=f32).astype(bf16)                  # (H, bt*n, Dh)

    c6 = jnp.broadcast_to(cb[None], (2 * heads,) + cb.shape)      # (2H, bt*m, Dc)
    kv_all = lax.dot_general(
        c6, wkv6, (((2,), (1,)), ((0,), (0,))),
        preferred_element_type=f32).astype(bf16)                  # (2H, bt*m, Dh)

    # Attention core per batch element (static unroll; bt is small per grid step).
    rows = []
    for b in range(bt):
        q = q_all[:, b * n:(b + 1) * n, :]                        # (H, n, Dh)
        k = kv_all[:heads, b * m:(b + 1) * m, :]                  # (H, m, Dh)
        v = kv_all[heads:, b * m:(b + 1) * m, :]                  # (H, m, Dh)

        sim = lax.dot_general(                                    # (H, n, m)  NT, batched
            q, k, (((2,), (2,)), ((0,), (0,))),
            preferred_element_type=f32)
        sim = sim + bias_all[b:b + 1]                             # broadcast (1, m)
        sim = sim - jnp.max(sim, axis=-1, keepdims=True)          # stable softmax
        p = jnp.exp(sim)
        inv = pl.reciprocal(jnp.sum(p, axis=-1, keepdims=True), approx=True)
        attn = (p * inv).astype(bf16)

        o = lax.dot_general(                                      # (H, n, Dh)
            attn, v, (((2,), (1,)), ((0,), (0,))),
            preferred_element_type=f32)
        part = lax.dot_general(                                   # (H, n, D)  per-head Wo
            o.astype(bf16), wo3, (((2,), (1,)), ((0,), (0,))),
            preferred_element_type=f32)
        acc = part[0]
        for h in range(1, heads):
            acc = acc + part[h]
        rows.append(acc)                                          # (n, D)

    attn_out = rows[0] if bt == 1 else jnp.concatenate(rows, axis=0)   # (bt*n, D)

    # output projection bias + residual with ORIGINAL latents
    h_attn = attn_out + bo_ref[...] + x

    # feed-forward branch; residual again adds the ORIGINAL latents (matches reference module)
    y = _layernorm(h_attn, ln_ff_w[...], ln_ff_b[...])
    y = jnp.dot(y.astype(bf16), w1_ref[...], preferred_element_type=f32) + b1_ref[...]
    y = jnp.maximum(y, 0.0)
    y = jnp.dot(y.astype(bf16), w2_ref[...], preferred_element_type=f32) + b2_ref[...]
    out_ref[...] = y + x


def cross_attention(latents, context, mask, params, *, heads, dim_head, batch_tile=None):
    B, N, D = latents.shape
    _, M, Dc = context.shape
    inner = heads * dim_head
    scale = dim_head ** -0.5
    bt = B if batch_tile is None else batch_tile
    assert B % bt == 0

    # Flatten to lane-major 2-D rows (free XLA reshapes).
    lat2 = latents.reshape(B * N, D).astype(jnp.float32)
    ctx2 = context.reshape(B * M, Dc).astype(jnp.float32)

    # Precompute additive mask bias on host: 0 where attended, -FLT_MAX where masked.
    neg = -jnp.finfo(jnp.float32).max
    bias = jnp.where(mask == 0, neg, 0.0).astype(jnp.float32)     # (B, M)

    # Head-major bf16 weights; fold the softmax scale into Wq (host-side, free).
    wq3 = jnp.transpose((params["wq"] * scale).reshape(D, heads, dim_head),
                        (1, 0, 2)).astype(jnp.bfloat16)           # (H, D, Dh)
    wkv = params["wkv"]                                           # (Dc, 2*inner): [k | v]
    wk3 = jnp.transpose(wkv[:, :inner].reshape(Dc, heads, dim_head), (1, 0, 2))
    wv3 = jnp.transpose(wkv[:, inner:].reshape(Dc, heads, dim_head), (1, 0, 2))
    wkv6 = jnp.concatenate([wk3, wv3], axis=0).astype(jnp.bfloat16)   # (2H, Dc, Dh)
    wo3 = params["wo"].reshape(heads, dim_head, D).astype(jnp.bfloat16)  # (H, Dh, D)
    w1 = params["w1"].astype(jnp.bfloat16)
    w2 = params["w2"].astype(jnp.bfloat16)

    kernel = functools.partial(cross_attention_kernel, bt=bt, n=N, m=M, heads=heads)

    def batched(rows, cols):
        return pl.BlockSpec((rows, cols), lambda i: (i, 0))

    def shared(shape):
        return pl.BlockSpec(shape, lambda i, _s=len(shape): (0,) * _s)

    out2 = pl.pallas_call(
        kernel,
        out_shape=jax.ShapeDtypeStruct((B * N, D), jnp.float32),
        grid=(B // bt,),
        in_specs=[
            batched(bt * N, D),                   # latents rows
            batched(bt * M, Dc),                  # context rows
            batched(bt, M),                       # additive mask bias
            shared((1, D)), shared((1, D)),       # ln_attn w/b
            shared((1, Dc)), shared((1, Dc)),     # ln_ctx  w/b
            shared((heads, D, dim_head)),         # Wq (head-major, scaled, bf16)
            shared((2 * heads, Dc, dim_head)),    # Wk|Wv (head-major, bf16)
            shared((heads, dim_head, D)),         # Wo (head-major, bf16)
            shared((1, D)),                       # bo
            shared((1, D)), shared((1, D)),       # ln_ff w/b
            shared((D, D)), shared((1, D)),       # W1 (bf16), b1
            shared((D, D)), shared((1, D)),       # W2 (bf16), b2
        ],
        out_specs=batched(bt * N, D),
        compiler_params=pltpu.CompilerParams(dimension_semantics=("parallel",)),
    )(lat2, ctx2, bias,
      params["ln_attn_w"], params["ln_attn_b"],
      params["ln_ctx_w"], params["ln_ctx_b"],
      wq3, wkv6, wo3, params["bo"],
      params["ln_ff_w"], params["ln_ff_b"],
      w1, params["b1"], w2, params["b2"])

    return out2.reshape(B, N, D)


def ref_forward(latents, context, mask, p, *, heads, dim_head):
    """Pure-JAX reference mirroring the PyTorch forward (eval mode, f32)."""
    hp = jax.lax.Precision.HIGHEST

    def ln(x, w, b):
        mu = x.mean(-1, keepdims=True)
        var = ((x - mu) ** 2).mean(-1, keepdims=True)
        return (x - mu) / jnp.sqrt(var + EPS) * w + b

    B, N, D = latents.shape
    inner = heads * dim_head
    x_n = ln(latents, p["ln_attn_w"][0], p["ln_attn_b"][0])
    c_n = ln(context, p["ln_ctx_w"][0], p["ln_ctx_b"][0])
    q = jnp.einsum("bnd,de->bne", x_n, p["wq"], precision=hp)
    kv = jnp.einsum("bmd,de->bme", c_n, p["wkv"], precision=hp)
    k, v = kv[..., :inner], kv[..., inner:]

    def split(t):
        b, s, _ = t.shape
        return t.reshape(b, s, heads, dim_head).transpose(0, 2, 1, 3)

    qh, kh, vh = split(q), split(k), split(v)
    sim = jnp.einsum("bhid,bhjd->bhij", qh, kh, precision=hp) * (dim_head ** -0.5)
    neg = -jnp.finfo(jnp.float32).max
    sim = jnp.where(mask[:, None, None, :] == 0, neg, sim)
    sim = sim - sim.max(-1, keepdims=True)
    attn = jnp.exp(sim)
    attn = attn / attn.sum(-1, keepdims=True)
    out = jnp.einsum("bhij,bhjd->bhid", attn, vh, precision=hp)
    out = out.transpose(0, 2, 1, 3).reshape(B, N, inner)
    proj = jnp.einsum("bne,ed->bnd", out, p["wo"], precision=hp) + p["bo"][0]
    h_attn = proj + latents
    y = ln(h_attn, p["ln_ff_w"][0], p["ln_ff_b"][0])
    y = jnp.maximum(jnp.einsum("bnd,de->bne", y, p["w1"], precision=hp) + p["b1"][0], 0.0)
    y = jnp.einsum("bne,ed->bnd", y, p["w2"], precision=hp) + p["b2"][0]
    return y + latents


if __name__ == "__main__":
    B, N, M = 2, 8, 16
    query_dim, context_dim = 32, 32
    heads, dim_head = 4, 16
    inner = heads * dim_head

    root = jax.random.PRNGKey(0)
    keys = jax.random.split(root, 20)

    def init(k, shape, s=0.05):
        return (s * jax.random.normal(k, shape)).astype(jnp.float32)

    params = {
        "ln_attn_w": 1.0 + init(keys[0], (1, query_dim), 0.1),
        "ln_attn_b": init(keys[1], (1, query_dim), 0.1),
        "ln_ctx_w": 1.0 + init(keys[2], (1, context_dim), 0.1),
        "ln_ctx_b": init(keys[3], (1, context_dim), 0.1),
        "wq": init(keys[4], (query_dim, inner)),
        "wkv": init(keys[5], (context_dim, 2 * inner)),   # single to_kv weight (k | v)
        "wo": init(keys[7], (inner, query_dim)),
        "bo": init(keys[8], (1, query_dim)),
        "ln_ff_w": 1.0 + init(keys[9], (1, query_dim), 0.1),
        "ln_ff_b": init(keys[10], (1, query_dim), 0.1),
        "w1": init(keys[11], (query_dim, query_dim)),
        "b1": init(keys[12], (1, query_dim)),
        "w2": init(keys[13], (query_dim, query_dim)),
        "b2": init(keys[14], (1, query_dim)),
    }

    latents = jax.random.normal(keys[15], (B, N, query_dim), jnp.float32)
    context = jax.random.normal(keys[16], (B, M, context_dim), jnp.float32)
    mask = jax.random.bernoulli(keys[17], 0.8, (B, M)).astype(jnp.int32)
    mask = mask.at[:, 0].set(1)   # keep at least one valid context token per batch

    out = cross_attention(latents, context, mask, params, heads=heads, dim_head=dim_head)
    out = jax.block_until_ready(out)

    ref = ref_forward(latents, context, mask, params, heads=heads, dim_head=dim_head)
    assert out.shape == (B, N, query_dim)
    assert bool(jnp.all(jnp.isfinite(out)))
    max_err = float(jnp.max(jnp.abs(out - ref)))
    assert bool(jnp.allclose(out, ref, atol=3e-2, rtol=3e-2)), max_err

    print("KERNEL_OK")
</pallas_src>

<mosaic_0001>
module attributes {stable_mosaic.version = 11 : i64} {
  func.func @cross_attention_kernel(%arg0: i32, %arg1: memref<16x32xf32, #tpu.memory_space<vmem>>, %arg2: memref<32x32xf32, #tpu.memory_space<vmem>>, %arg3: memref<2x16xf32, #tpu.memory_space<vmem>>, %arg4: memref<1x32xf32, #tpu.memory_space<vmem>>, %arg5: memref<1x32xf32, #tpu.memory_space<vmem>>, %arg6: memref<1x32xf32, #tpu.memory_space<vmem>>, %arg7: memref<1x32xf32, #tpu.memory_space<vmem>>, %arg8: memref<4x32x16xbf16, #tpu.memory_space<vmem>>, %arg9: memref<8x32x16xbf16, #tpu.memory_space<vmem>>, %arg10: memref<4x16x32xbf16, #tpu.memory_space<vmem>>, %arg11: memref<1x32xf32, #tpu.memory_space<vmem>>, %arg12: memref<1x32xf32, #tpu.memory_space<vmem>>, %arg13: memref<1x32xf32, #tpu.memory_space<vmem>>, %arg14: memref<32x32xbf16, #tpu.memory_space<vmem>>, %arg15: memref<1x32xf32, #tpu.memory_space<vmem>>, %arg16: memref<32x32xbf16, #tpu.memory_space<vmem>>, %arg17: memref<1x32xf32, #tpu.memory_space<vmem>>, %arg18: memref<16x32xf32, #tpu.memory_space<vmem>>) attributes {dimension_semantics = [#tpu.dimension_semantics<parallel>], iteration_bounds = array<i64: 1>, scalar_prefetch = 0 : i64, scratch_operands = 0 : i64, tpu.core_type = #tpu.core_type<tc>, window_params = [{transform_indices = @transform_0, window_bounds = array<i64: 16, 32>}, {transform_indices = @transform_1, window_bounds = array<i64: 32, 32>}, {transform_indices = @transform_2, window_bounds = array<i64: 2, 16>}, {pipeline_mode = #tpu.pipeline_mode<synchronous>, transform_indices = @transform_3, window_bounds = array<i64: 1, 32>}, {pipeline_mode = #tpu.pipeline_mode<synchronous>, transform_indices = @transform_4, window_bounds = array<i64: 1, 32>}, {pipeline_mode = #tpu.pipeline_mode<synchronous>, transform_indices = @transform_5, window_bounds = array<i64: 1, 32>}, {pipeline_mode = #tpu.pipeline_mode<synchronous>, transform_indices = @transform_6, window_bounds = array<i64: 1, 32>}, {pipeline_mode = #tpu.pipeline_mode<synchronous>, transform_indices = @transform_7, window_bounds = array<i64: 4, 32, 16>}, {pipeline_mode = #tpu.pipeline_mode<synchronous>, transform_indices = @transform_8, window_bounds = array<i64: 8, 32, 16>}, {pipeline_mode = #tpu.pipeline_mode<synchronous>, transform_indices = @transform_9, window_bounds = array<i64: 4, 16, 32>}, {pipeline_mode = #tpu.pipeline_mode<synchronous>, transform_indices = @transform_10, window_bounds = array<i64: 1, 32>}, {pipeline_mode = #tpu.pipeline_mode<synchronous>, transform_indices = @transform_11, window_bounds = array<i64: 1, 32>}, {pipeline_mode = #tpu.pipeline_mode<synchronous>, transform_indices = @transform_12, window_bounds = array<i64: 1, 32>}, {pipeline_mode = #tpu.pipeline_mode<synchronous>, transform_indices = @transform_13, window_bounds = array<i64: 32, 32>}, {pipeline_mode = #tpu.pipeline_mode<synchronous>, transform_indices = @transform_14, window_bounds = array<i64: 1, 32>}, {pipeline_mode = #tpu.pipeline_mode<synchronous>, transform_indices = @transform_15, window_bounds = array<i64: 32, 32>}, {pipeline_mode = #tpu.pipeline_mode<synchronous>, transform_indices = @transform_16, window_bounds = array<i64: 1, 32>}, {transform_indices = @transform_17, window_bounds = array<i64: 16, 32>}]} {
    %c0 = arith.constant 0 : index
    %c0_0 = arith.constant 0 : index
    %0 = vector.load %arg1[%c0, %c0_0] : memref<16x32xf32, #tpu.memory_space<vmem>>, vector<16x32xf32>
    %c0_1 = arith.constant 0 : index
    %c0_2 = arith.constant 0 : index
    %1 = vector.load %arg2[%c0_1, %c0_2] : memref<32x32xf32, #tpu.memory_space<vmem>>, vector<32x32xf32>
    %c0_3 = arith.constant 0 : index
    %c0_4 = arith.constant 0 : index
    %2 = vector.load %arg3[%c0_3, %c0_4] : memref<2x16xf32, #tpu.memory_space<vmem>>, vector<2x16xf32>
    %c0_5 = arith.constant 0 : index
    %c0_6 = arith.constant 0 : index
    %3 = vector.load %arg4[%c0_5, %c0_6] : memref<1x32xf32, #tpu.memory_space<vmem>>, vector<1x32xf32>
    %c0_7 = arith.constant 0 : index
    %c0_8 = arith.constant 0 : index
    %4 = vector.load %arg5[%c0_7, %c0_8] : memref<1x32xf32, #tpu.memory_space<vmem>>, vector<1x32xf32>
    %cst = arith.constant dense<0.000000e+00> : vector<16xf32>
    %5 = vector.multi_reduction <add>, %0, %cst [1] : vector<16x32xf32> to vector<16xf32>
    %6 = vector.shape_cast %5 : vector<16xf32> to vector<16x1xf32>
    %cst_9 = arith.constant 3.200000e+01 : f32
    %7 = vector.broadcast %cst_9 : f32 to vector<16x1xf32>
    %8 = arith.divf %6, %7 : vector<16x1xf32>
    %9 = vector.broadcast %8 : vector<16x1xf32> to vector<16x32xf32>
    %10 = arith.subf %0, %9 : vector<16x32xf32>
    %11 = arith.mulf %10, %10 : vector<16x32xf32>
    %cst_10 = arith.constant dense<0.000000e+00> : vector<16xf32>
    %12 = vector.multi_reduction <add>, %11, %cst_10 [1] : vector<16x32xf32> to vector<16xf32>
    %13 = vector.shape_cast %12 : vector<16xf32> to vector<16x1xf32>
    %cst_11 = arith.constant 3.200000e+01 : f32
    %14 = vector.broadcast %cst_11 : f32 to vector<16x1xf32>
    %15 = arith.divf %13, %14 : vector<16x1xf32>
    %16 = vector.broadcast %8 : vector<16x1xf32> to vector<16x32xf32>
    %17 = arith.subf %0, %16 : vector<16x32xf32>
    %cst_12 = arith.constant 9.99999974E-6 : f32
    %18 = vector.broadcast %cst_12 : f32 to vector<16x1xf32>
    %19 = arith.addf %15, %18 : vector<16x1xf32>
    %20 = math.rsqrt %19 : vector<16x1xf32>
    %21 = vector.broadcast %20 : vector<16x1xf32> to vector<16x32xf32>
    %22 = arith.mulf %17, %21 : vector<16x32xf32>
    %23 = vector.broadcast %3 : vector<1x32xf32> to vector<16x32xf32>
    %24 = arith.mulf %22, %23 : vector<16x32xf32>
    %25 = vector.broadcast %4 : vector<1x32xf32> to vector<16x32xf32>
    %26 = arith.addf %24, %25 : vector<16x32xf32>
    %c0_13 = arith.constant 0 : index
    %c0_14 = arith.constant 0 : index
    %27 = vector.load %arg6[%c0_13, %c0_14] : memref<1x32xf32, #tpu.memory_space<vmem>>, vector<1x32xf32>
    %c0_15 = arith.constant 0 : index
    %c0_16 = arith.constant 0 : index
    %28 = vector.load %arg7[%c0_15, %c0_16] : memref<1x32xf32, #tpu.memory_space<vmem>>, vector<1x32xf32>
    %cst_17 = arith.constant dense<0.000000e+00> : vector<32xf32>
    %29 = vector.multi_reduction <add>, %1, %cst_17 [1] : vector<32x32xf32> to vector<32xf32>
    %30 = vector.shape_cast %29 : vector<32xf32> to vector<32x1xf32>
    %cst_18 = arith.constant 3.200000e+01 : f32
    %31 = vector.broadcast %cst_18 : f32 to vector<32x1xf32>
    %32 = arith.divf %30, %31 : vector<32x1xf32>
    %33 = vector.broadcast %32 : vector<32x1xf32> to vector<32x32xf32>
    %34 = arith.subf %1, %33 : vector<32x32xf32>
    %35 = arith.mulf %34, %34 : vector<32x32xf32>
    %cst_19 = arith.constant dense<0.000000e+00> : vector<32xf32>
    %36 = vector.multi_reduction <add>, %35, %cst_19 [1] : vector<32x32xf32> to vector<32xf32>
    %37 = vector.shape_cast %36 : vector<32xf32> to vector<32x1xf32>
    %cst_20 = arith.constant 3.200000e+01 : f32
    %38 = vector.broadcast %cst_20 : f32 to vector<32x1xf32>
    %39 = arith.divf %37, %38 : vector<32x1xf32>
    %40 = vector.broadcast %32 : vector<32x1xf32> to vector<32x32xf32>
    %41 = arith.subf %1, %40 : vector<32x32xf32>
    %cst_21 = arith.constant 9.99999974E-6 : f32
    %42 = vector.broadcast %cst_21 : f32 to vector<32x1xf32>
    %43 = arith.addf %39, %42 : vector<32x1xf32>
    %44 = math.rsqrt %43 : vector<32x1xf32>
    %45 = vector.broadcast %44 : vector<32x1xf32> to vector<32x32xf32>
    %46 = arith.mulf %41, %45 : vector<32x32xf32>
    %47 = vector.broadcast %27 : vector<1x32xf32> to vector<32x32xf32>
    %48 = arith.mulf %46, %47 : vector<32x32xf32>
    %49 = vector.broadcast %28 : vector<1x32xf32> to vector<32x32xf32>
    %50 = arith.addf %48, %49 : vector<32x32xf32>
    %51 = arith.truncf %26 : vector<16x32xf32> to vector<16x32xbf16>
    %52 = arith.truncf %50 : vector<32x32xf32> to vector<32x32xbf16>
    %c0_22 = arith.constant 0 : index
    %c0_23 = arith.constant 0 : index
    %c0_24 = arith.constant 0 : index
    %53 = vector.load %arg8[%c0_22, %c0_23, %c0_24] : memref<4x32x16xbf16, #tpu.memory_space<vmem>>, vector<4x32x16xbf16>
    %c0_25 = arith.constant 0 : index
    %c0_26 = arith.constant 0 : index
    %c0_27 = arith.constant 0 : index
    %54 = vector.load %arg9[%c0_25, %c0_26, %c0_27] : memref<8x32x16xbf16, #tpu.memory_space<vmem>>, vector<8x32x16xbf16>
    %c0_28 = arith.constant 0 : index
    %c0_29 = arith.constant 0 : index
    %c0_30 = arith.constant 0 : index
    %55 = vector.load %arg10[%c0_28, %c0_29, %c0_30] : memref<4x16x32xbf16, #tpu.memory_space<vmem>>, vector<4x16x32xbf16>
    %56 = vector.shape_cast %51 : vector<16x32xbf16> to vector<1x16x32xbf16>
    %57 = vector.shape_cast %56 : vector<1x16x32xbf16> to vector<1x16x32xbf16>
    %58 = vector.broadcast %57 : vector<1x16x32xbf16> to vector<4x16x32xbf16>
    %cst_31 = arith.constant dense<0.000000e+00> : vector<4x16x16xf32>
    %59 = tpu.matmul %58, %53, %cst_31 {dimension_numbers = #tpu.dot_dimension_numbers<[2], [1], [1], [2], [0, 0, 0, 1, 1, 2], [0], [0]>} : vector<4x16x32xbf16>, vector<4x32x16xbf16>, vector<4x16x16xf32> -> vector<4x16x16xf32>
    %60 = arith.truncf %59 : vector<4x16x16xf32> to vector<4x16x16xbf16>
    %61 = vector.shape_cast %52 : vector<32x32xbf16> to vector<1x32x32xbf16>
    %62 = vector.shape_cast %61 : vector<1x32x32xbf16> to vector<1x32x32xbf16>
    %63 = vector.broadcast %62 : vector<1x32x32xbf16> to vector<8x32x32xbf16>
    %cst_32 = arith.constant dense<0.000000e+00> : vector<8x32x16xf32>
    %64 = tpu.matmul %63, %54, %cst_32 {dimension_numbers = #tpu.dot_dimension_numbers<[2], [1], [1], [2], [0, 0, 0, 1, 1, 2], [0], [0]>} : vector<8x32x32xbf16>, vector<8x32x16xbf16>, vector<8x32x16xf32> -> vector<8x32x16xf32>
    %65 = arith.truncf %64 : vector<8x32x16xf32> to vector<8x32x16xbf16>
    %66 = vector.extract_strided_slice %60 {offsets = [0, 0, 0], sizes = [4, 8, 16], strides = [1, 1, 1]} : vector<4x16x16xbf16> to vector<4x8x16xbf16>
    %67 = vector.extract_strided_slice %65 {offsets = [0, 0, 0], sizes = [4, 16, 16], strides = [1, 1, 1]} : vector<8x32x16xbf16> to vector<4x16x16xbf16>
    %68 = vector.extract_strided_slice %65 {offsets = [4, 0, 0], sizes = [4, 16, 16], strides = [1, 1, 1]} : vector<8x32x16xbf16> to vector<4x16x16xbf16>
    %cst_33 = arith.constant dense<0.000000e+00> : vector<4x8x16xf32>
    %69 = tpu.matmul %66, %67, %cst_33 {dimension_numbers = #tpu.dot_dimension_numbers<[2], [2], [1], [1], [0, 0, 0, 1, 1, 1], [0], [0]>} : vector<4x8x16xbf16>, vector<4x16x16xbf16>, vector<4x8x16xf32> -> vector<4x8x16xf32>
    %70 = vector.extract_strided_slice %2 {offsets = [0, 0], sizes = [1, 16], strides = [1, 1]} : vector<2x16xf32> to vector<1x16xf32>
    %71 = vector.shape_cast %70 : vector<1x16xf32> to vector<1x1x16xf32>
    %72 = vector.broadcast %71 : vector<1x1x16xf32> to vector<4x8x16xf32>
    %73 = arith.addf %69, %72 : vector<4x8x16xf32>
    %cst_34 = arith.constant dense<0xFF800000> : vector<4x8xf32>
    %74 = vector.multi_reduction <maximumf>, %73, %cst_34 [2] : vector<4x8x16xf32> to vector<4x8xf32>
    %75 = vector.shape_cast %74 : vector<4x8xf32> to vector<4x8x1xf32>
    %76 = vector.broadcast %75 : vector<4x8x1xf32> to vector<4x8x16xf32>
    %77 = arith.subf %73, %76 : vector<4x8x16xf32>
    %78 = math.exp %77 : vector<4x8x16xf32>
    %cst_35 = arith.constant dense<0.000000e+00> : vector<4x8xf32>
    %79 = vector.multi_reduction <add>, %78, %cst_35 [2] : vector<4x8x16xf32> to vector<4x8xf32>
    %80 = vector.shape_cast %79 : vector<4x8xf32> to vector<4x8x1xf32>
    %81 = tpu.reciprocal %80 {approx = true} : vector<4x8x1xf32> -> vector<4x8x1xf32>
    %82 = vector.broadcast %81 : vector<4x8x1xf32> to vector<4x8x16xf32>
    %83 = arith.mulf %78, %82 : vector<4x8x16xf32>
    %84 = arith.truncf %83 : vector<4x8x16xf32> to vector<4x8x16xbf16>
    %cst_36 = arith.constant dense<0.000000e+00> : vector<4x8x16xf32>
    %85 = tpu.matmul %84, %68, %cst_36 {dimension_numbers = #tpu.dot_dimension_numbers<[2], [1], [1], [2], [0, 0, 0, 1, 1, 2], [0], [0]>} : vector<4x8x16xbf16>, vector<4x16x16xbf16>, vector<4x8x16xf32> -> vector<4x8x16xf32>
    %86 = arith.truncf %85 : vector<4x8x16xf32> to vector<4x8x16xbf16>
    %cst_37 = arith.constant dense<0.000000e+00> : vector<4x8x32xf32>
    %87 = tpu.matmul %86, %55, %cst_37 {dimension_numbers = #tpu.dot_dimension_numbers<[2], [1], [1], [2], [0, 0, 0, 1, 1, 2], [0], [0]>} : vector<4x8x16xbf16>, vector<4x16x32xbf16>, vector<4x8x32xf32> -> vector<4x8x32xf32>
    %88 = vector.extract_strided_slice %87 {offsets = [0, 0, 0], sizes = [1, 8, 32], strides = [1, 1, 1]} : vector<4x8x32xf32> to vector<1x8x32xf32>
    %89 = vector.shape_cast %88 : vector<1x8x32xf32> to vector<8x32xf32>
    %90 = vector.extract_strided_slice %87 {offsets = [1, 0, 0], sizes = [1, 8, 32], strides = [1, 1, 1]} : vector<4x8x32xf32> to vector<1x8x32xf32>
    %91 = vector.shape_cast %90 : vector<1x8x32xf32> to vector<8x32xf32>
    %92 = arith.addf %89, %91 : vector<8x32xf32>
    %93 = vector.extract_strided_slice %87 {offsets = [2, 0, 0], sizes = [1, 8, 32], strides = [1, 1, 1]} : vector<4x8x32xf32> to vector<1x8x32xf32>
    %94 = vector.shape_cast %93 : vector<1x8x32xf32> to vector<8x32xf32>
    %95 = arith.addf %92, %94 : vector<8x32xf32>
    %96 = vector.extract_strided_slice %87 {offsets = [3, 0, 0], sizes = [1, 8, 32], strides = [1, 1, 1]} : vector<4x8x32xf32> to vector<1x8x32xf32>
    %97 = vector.shape_cast %96 : vector<1x8x32xf32> to vector<8x32xf32>
    %98 = arith.addf %95, %97 : vector<8x32xf32>
    %99 = vector.extract_strided_slice %60 {offsets = [0, 8, 0], sizes = [4, 8, 16], strides = [1, 1, 1]} : vector<4x16x16xbf16> to vector<4x8x16xbf16>
    %100 = vector.extract_strided_slice %65 {offsets = [0, 16, 0], sizes = [4, 16, 16], strides = [1, 1, 1]} : vector<8x32x16xbf16> to vector<4x16x16xbf16>
    %101 = vector.extract_strided_slice %65 {offsets = [4, 16, 0], sizes = [4, 16, 16], strides = [1, 1, 1]} : vector<8x32x16xbf16> to vector<4x16x16xbf16>
    %cst_38 = arith.constant dense<0.000000e+00> : vector<4x8x16xf32>
    %102 = tpu.matmul %99, %100, %cst_38 {dimension_numbers = #tpu.dot_dimension_numbers<[2], [2], [1], [1], [0, 0, 0, 1, 1, 1], [0], [0]>} : vector<4x8x16xbf16>, vector<4x16x16xbf16>, vector<4x8x16xf32> -> vector<4x8x16xf32>
    %103 = vector.extract_strided_slice %2 {offsets = [1, 0], sizes = [1, 16], strides = [1, 1]} : vector<2x16xf32> to vector<1x16xf32>
    %104 = vector.shape_cast %103 : vector<1x16xf32> to vector<1x1x16xf32>
    %105 = vector.broadcast %104 : vector<1x1x16xf32> to vector<4x8x16xf32>
    %106 = arith.addf %102, %105 : vector<4x8x16xf32>
    %cst_39 = arith.constant dense<0xFF800000> : vector<4x8xf32>
    %107 = vector.multi_reduction <maximumf>, %106, %cst_39 [2] : vector<4x8x16xf32> to vector<4x8xf32>
    %108 = vector.shape_cast %107 : vector<4x8xf32> to vector<4x8x1xf32>
    %109 = vector.broadcast %108 : vector<4x8x1xf32> to vector<4x8x16xf32>
    %110 = arith.subf %106, %109 : vector<4x8x16xf32>
    %111 = math.exp %110 : vector<4x8x16xf32>
    %cst_40 = arith.constant dense<0.000000e+00> : vector<4x8xf32>
    %112 = vector.multi_reduction <add>, %111, %cst_40 [2] : vector<4x8x16xf32> to vector<4x8xf32>
    %113 = vector.shape_cast %112 : vector<4x8xf32> to vector<4x8x1xf32>
    %114 = tpu.reciprocal %113 {approx = true} : vector<4x8x1xf32> -> vector<4x8x1xf32>
    %115 = vector.broadcast %114 : vector<4x8x1xf32> to vector<4x8x16xf32>
    %116 = arith.mulf %111, %115 : vector<4x8x16xf32>
    %117 = arith.truncf %116 : vector<4x8x16xf32> to vector<4x8x16xbf16>
    %cst_41 = arith.constant dense<0.000000e+00> : vector<4x8x16xf32>
    %118 = tpu.matmul %117, %101, %cst_41 {dimension_numbers = #tpu.dot_dimension_numbers<[2], [1], [1], [2], [0, 0, 0, 1, 1, 2], [0], [0]>} : vector<4x8x16xbf16>, vector<4x16x16xbf16>, vector<4x8x16xf32> -> vector<4x8x16xf32>
    %119 = arith.truncf %118 : vector<4x8x16xf32> to vector<4x8x16xbf16>
    %cst_42 = arith.constant dense<0.000000e+00> : vector<4x8x32xf32>
    %120 = tpu.matmul %119, %55, %cst_42 {dimension_numbers = #tpu.dot_dimension_numbers<[2], [1], [1], [2], [0, 0, 0, 1, 1, 2], [0], [0]>} : vector<4x8x16xbf16>, vector<4x16x32xbf16>, vector<4x8x32xf32> -> vector<4x8x32xf32>
    %121 = vector.extract_strided_slice %120 {offsets = [0, 0, 0], sizes = [1, 8, 32], strides = [1, 1, 1]} : vector<4x8x32xf32> to vector<1x8x32xf32>
    %122 = vector.shape_cast %121 : vector<1x8x32xf32> to vector<8x32xf32>
    %123 = vector.extract_strided_slice %120 {offsets = [1, 0, 0], sizes = [1, 8, 32], strides = [1, 1, 1]} : vector<4x8x32xf32> to vector<1x8x32xf32>
    %124 = vector.shape_cast %123 : vector<1x8x32xf32> to vector<8x32xf32>
    %125 = arith.addf %122, %124 : vector<8x32xf32>
    %126 = vector.extract_strided_slice %120 {offsets = [2, 0, 0], sizes = [1, 8, 32], strides = [1, 1, 1]} : vector<4x8x32xf32> to vector<1x8x32xf32>
    %127 = vector.shape_cast %126 : vector<1x8x32xf32> to vector<8x32xf32>
    %128 = arith.addf %125, %127 : vector<8x32xf32>
    %129 = vector.extract_strided_slice %120 {offsets = [3, 0, 0], sizes = [1, 8, 32], strides = [1, 1, 1]} : vector<4x8x32xf32> to vector<1x8x32xf32>
    %130 = vector.shape_cast %129 : vector<1x8x32xf32> to vector<8x32xf32>
    %131 = arith.addf %128, %130 : vector<8x32xf32>
    %132 = tpu.concatenate %98, %131 in 0 : vector<8x32xf32>, vector<8x32xf32> -> vector<16x32xf32>
    %c0_43 = arith.constant 0 : index
    %c0_44 = arith.constant 0 : index
    %133 = vector.load %arg11[%c0_43, %c0_44] : memref<1x32xf32, #tpu.memory_space<vmem>>, vector<1x32xf32>
    %134 = vector.broadcast %133 : vector<1x32xf32> to vector<16x32xf32>
    %135 = arith.addf %132, %134 : vector<16x32xf32>
    %136 = arith.addf %135, %0 : vector<16x32xf32>
    %c0_45 = arith.constant 0 : index
    %c0_46 = arith.constant 0 : index
    %137 = vector.load %arg12[%c0_45, %c0_46] : memref<1x32xf32, #tpu.memory_space<vmem>>, vector<1x32xf32>
    %c0_47 = arith.constant 0 : index
    %c0_48 = arith.constant 0 : index
    %138 = vector.load %arg13[%c0_47, %c0_48] : memref<1x32xf32, #tpu.memory_space<vmem>>, vector<1x32xf32>
    %cst_49 = arith.constant dense<0.000000e+00> : vector<16xf32>
    %139 = vector.multi_reduction <add>, %136, %cst_49 [1] : vector<16x32xf32> to vector<16xf32>
    %140 = vector.shape_cast %139 : vector<16xf32> to vector<16x1xf32>
    %cst_50 = arith.constant 3.200000e+01 : f32
    %141 = vector.broadcast %cst_50 : f32 to vector<16x1xf32>
    %142 = arith.divf %140, %141 : vector<16x1xf32>
    %143 = vector.broadcast %142 : vector<16x1xf32> to vector<16x32xf32>
    %144 = arith.subf %136, %143 : vector<16x32xf32>
    %145 = arith.mulf %144, %144 : vector<16x32xf32>
    %cst_51 = arith.constant dense<0.000000e+00> : vector<16xf32>
    %146 = vector.multi_reduction <add>, %145, %cst_51 [1] : vector<16x32xf32> to vector<16xf32>
    %147 = vector.shape_cast %146 : vector<16xf32> to vector<16x1xf32>
    %cst_52 = arith.constant 3.200000e+01 : f32
    %148 = vector.broadcast %cst_52 : f32 to vector<16x1xf32>
    %149 = arith.divf %147, %148 : vector<16x1xf32>
    %150 = vector.broadcast %142 : vector<16x1xf32> to vector<16x32xf32>
    %151 = arith.subf %136, %150 : vector<16x32xf32>
    %cst_53 = arith.constant 9.99999974E-6 : f32
    %152 = vector.broadcast %cst_53 : f32 to vector<16x1xf32>
    %153 = arith.addf %149, %152 : vector<16x1xf32>
    %154 = math.rsqrt %153 : vector<16x1xf32>
    %155 = vector.broadcast %154 : vector<16x1xf32> to vector<16x32xf32>
    %156 = arith.mulf %151, %155 : vector<16x32xf32>
    %157 = vector.broadcast %137 : vector<1x32xf32> to vector<16x32xf32>
    %158 = arith.mulf %156, %157 : vector<16x32xf32>
    %159 = vector.broadcast %138 : vector<1x32xf32> to vector<16x32xf32>
    %160 = arith.addf %158, %159 : vector<16x32xf32>
    %161 = arith.truncf %160 : vector<16x32xf32> to vector<16x32xbf16>
    %c0_54 = arith.constant 0 : index
    %c0_55 = arith.constant 0 : index
    %162 = vector.load %arg14[%c0_54, %c0_55] : memref<32x32xbf16, #tpu.memory_space<vmem>>, vector<32x32xbf16>
    %cst_56 = arith.constant dense<0.000000e+00> : vector<16x32xf32>
    %163 = tpu.matmul %161, %162, %cst_56 {dimension_numbers = #tpu.dot_dimension_numbers<[1], [0], [0], [1], [0, 0, 1, 1], [], []>} : vector<16x32xbf16>, vector<32x32xbf16>, vector<16x32xf32> -> vector<16x32xf32>
    %c0_57 = arith.constant 0 : index
    %c0_58 = arith.constant 0 : index
    %164 = vector.load %arg15[%c0_57, %c0_58] : memref<1x32xf32, #tpu.memory_space<vmem>>, vector<1x32xf32>
    %165 = vector.broadcast %164 : vector<1x32xf32> to vector<16x32xf32>
    %166 = arith.addf %163, %165 : vector<16x32xf32>
    %cst_59 = arith.constant 0.000000e+00 : f32
    %167 = vector.broadcast %cst_59 : f32 to vector<16x32xf32>
    %168 = arith.maximumf %166, %167 : vector<16x32xf32>
    %169 = arith.truncf %168 : vector<16x32xf32> to vector<16x32xbf16>
    %c0_60 = arith.constant 0 : index
    %c0_61 = arith.constant 0 : index
    %170 = vector.load %arg16[%c0_60, %c0_61] : memref<32x32xbf16, #tpu.memory_space<vmem>>, vector<32x32xbf16>
    %cst_62 = arith.constant dense<0.000000e+00> : vector<16x32xf32>
    %171 = tpu.matmul %169, %170, %cst_62 {dimension_numbers = #tpu.dot_dimension_numbers<[1], [0], [0], [1], [0, 0, 1, 1], [], []>} : vector<16x32xbf16>, vector<32x32xbf16>, vector<16x32xf32> -> vector<16x32xf32>
    %c0_63 = arith.constant 0 : index
    %c0_64 = arith.constant 0 : index
    %172 = vector.load %arg17[%c0_63, %c0_64] : memref<1x32xf32, #tpu.memory_space<vmem>>, vector<1x32xf32>
    %173 = vector.broadcast %172 : vector<1x32xf32> to vector<16x32xf32>
    %174 = arith.addf %171, %173 : vector<16x32xf32>
    %175 = arith.addf %174, %0 : vector<16x32xf32>
    %c0_65 = arith.constant 0 : index
    %c0_66 = arith.constant 0 : index
    %176 = vector.load %arg18[%c0_65, %c0_66] : memref<16x32xf32, #tpu.memory_space<vmem>>, vector<16x32xf32>
    tpu.vector_store %arg18[%c0_65, %c0_66], %175 {strides = array<i32>} : memref<16x32xf32, #tpu.memory_space<vmem>>, vector<16x32xf32>,
    return
  }
  func.func @transform_0(%arg0: i32) -> (i32, i32) {
    %c0_i32 = arith.constant 0 : i32
    %c0_i32_0 = arith.constant 0 : i32
    return %arg0, %c0_i32 : i32, i32
  }
  func.func @transform_1(%arg0: i32) -> (i32, i32) {
    %c0_i32 = arith.constant 0 : i32
    %c0_i32_0 = arith.constant 0 : i32
    return %arg0, %c0_i32 : i32, i32
  }
  func.func @transform_2(%arg0: i32) -> (i32, i32) {
    %c0_i32 = arith.constant 0 : i32
    %c0_i32_0 = arith.constant 0 : i32
    return %arg0, %c0_i32 : i32, i32
  }
  func.func @transform_3(%arg0: i32) -> (i32, i32) {
    %c0_i32 = arith.constant 0 : i32
    %c0_i32_0 = arith.constant 0 : i32
    %c0_i32_1 = arith.constant 0 : i32
    return %c0_i32, %c0_i32_0 : i32, i32
  }
  func.func @transform_4(%arg0: i32) -> (i32, i32) {
    %c0_i32 = arith.constant 0 : i32
    %c0_i32_0 = arith.constant 0 : i32
    %c0_i32_1 = arith.constant 0 : i32
    return %c0_i32, %c0_i32_0 : i32, i32
  }
  func.func @transform_5(%arg0: i32) -> (i32, i32) {
    %c0_i32 = arith.constant 0 : i32
    %c0_i32_0 = arith.constant 0 : i32
    %c0_i32_1 = arith.constant 0 : i32
    return %c0_i32, %c0_i32_0 : i32, i32
  }
  func.func @transform_6(%arg0: i32) -> (i32, i32) {
    %c0_i32 = arith.constant 0 : i32
    %c0_i32_0 = arith.constant 0 : i32
    %c0_i32_1 = arith.constant 0 : i32
    return %c0_i32, %c0_i32_0 : i32, i32
  }
  func.func @transform_7(%arg0: i32) -> (i32, i32, i32) {
    %c0_i32 = arith.constant 0 : i32
    %c0_i32_0 = arith.constant 0 : i32
    %c0_i32_1 = arith.constant 0 : i32
    %c0_i32_2 = arith.constant 0 : i32
    return %c0_i32, %c0_i32_0, %c0_i32_1 : i32, i32, i32
  }
  func.func @transform_8(%arg0: i32) -> (i32, i32, i32) {
    %c0_i32 = arith.constant 0 : i32
    %c0_i32_0 = arith.constant 0 : i32
    %c0_i32_1 = arith.constant 0 : i32
    %c0_i32_2 = arith.constant 0 : i32
    return %c0_i32, %c0_i32_0, %c0_i32_1 : i32, i32, i32
  }
  func.func @transform_9(%arg0: i32) -> (i32, i32, i32) {
    %c0_i32 = arith.constant 0 : i32
    %c0_i32_0 = arith.constant 0 : i32
    %c0_i32_1 = arith.constant 0 : i32
    %c0_i32_2 = arith.constant 0 : i32
    return %c0_i32, %c0_i32_0, %c0_i32_1 : i32, i32, i32
  }
  func.func @transform_10(%arg0: i32) -> (i32, i32) {
    %c0_i32 = arith.constant 0 : i32
    %c0_i32_0 = arith.constant 0 : i32
    %c0_i32_1 = arith.constant 0 : i32
    return %c0_i32, %c0_i32_0 : i32, i32
  }
  func.func @transform_11(%arg0: i32) -> (i32, i32) {
    %c0_i32 = arith.constant 0 : i32
    %c0_i32_0 = arith.constant 0 : i32
    %c0_i32_1 = arith.constant 0 : i32
    return %c0_i32, %c0_i32_0 : i32, i32
  }
  func.func @transform_12(%arg0: i32) -> (i32, i32) {
    %c0_i32 = arith.constant 0 : i32
    %c0_i32_0 = arith.constant 0 : i32
    %c0_i32_1 = arith.constant 0 : i32
    return %c0_i32, %c0_i32_0 : i32, i32
  }
  func.func @transform_13(%arg0: i32) -> (i32, i32) {
    %c0_i32 = arith.constant 0 : i32
    %c0_i32_0 = arith.constant 0 : i32
    %c0_i32_1 = arith.constant 0 : i32
    return %c0_i32, %c0_i32_0 : i32, i32
  }
  func.func @transform_14(%arg0: i32) -> (i32, i32) {
    %c0_i32 = arith.constant 0 : i32
    %c0_i32_0 = arith.constant 0 : i32
    %c0_i32_1 = arith.constant 0 : i32
    return %c0_i32, %c0_i32_0 : i32, i32
  }
  func.func @transform_15(%arg0: i32) -> (i32, i32) {
    %c0_i32 = arith.constant 0 : i32
    %c0_i32_0 = arith.constant 0 : i32
    %c0_i32_1 = arith.constant 0 : i32
    return %c0_i32, %c0_i32_0 : i32, i32
  }
  func.func @transform_16(%arg0: i32) -> (i32, i32) {
    %c0_i32 = arith.constant 0 : i32
    %c0_i32_0 = arith.constant 0 : i32
    %c0_i32_1 = arith.constant 0 : i32
    return %c0_i32, %c0_i32_0 : i32, i32
  }
  func.func @transform_17(%arg0: i32) -> (i32, i32) {
    %c0_i32 = arith.constant 0 : i32
    %c0_i32_0 = arith.constant 0 : i32
    return %arg0, %c0_i32 : i32, i32
  }
}

</mosaic_0001>

<llo_original>
// kernel: tpu_custom_call.1
$region0: #{tpu_custom_call.1}
  #allocation0 [shape = 'u32[]', space=smem, size = 0x4, offset = 0x4, fixed_abs, tag = 'smem constant byte address 0x4 - core index']
  #allocation1 [shape = 'u32[144,128]{1,0:T(1,128)}', space=vmem, size = 0x12000, scoped, tag = 'internal scratch']
  %s0 = inlined_call_operand.vmem [shape: f32[16,32], index: 0, kind: input, shape index: {}]
  %s1 = inlined_call_operand.vmem [shape: f32[32,32], index: 1, kind: input, shape index: {}]
  %s2 = inlined_call_operand.vmem [shape: f32[2,16], index: 2, kind: input, shape index: {}]
  %s3 = inlined_call_operand.vmem [shape: f32[1,32], index: 3, kind: input, shape index: {}]
  %s4 = inlined_call_operand.vmem [shape: f32[1,32], index: 4, kind: input, shape index: {}]
  %s5 = inlined_call_operand.vmem [shape: f32[1,32], index: 5, kind: input, shape index: {}]
  %s6 = inlined_call_operand.vmem [shape: f32[1,32], index: 6, kind: input, shape index: {}]
  %s7 = inlined_call_operand.vmem [shape: bf16[4,32,16], index: 7, kind: input, shape index: {}]
  %s8 = inlined_call_operand.vmem [shape: bf16[8,32,16], index: 8, kind: input, shape index: {}]
  %s9 = inlined_call_operand.vmem [shape: bf16[4,16,32], index: 9, kind: input, shape index: {}]
  %s10 = inlined_call_operand.vmem [shape: f32[1,32], index: 10, kind: input, shape index: {}]
  %s11 = inlined_call_operand.vmem [shape: f32[1,32], index: 11, kind: input, shape index: {}]
  %s12 = inlined_call_operand.vmem [shape: f32[1,32], index: 12, kind: input, shape index: {}]
  %s13 = inlined_call_operand.vmem [shape: bf16[32,32], index: 13, kind: input, shape index: {}]
  %s14 = inlined_call_operand.vmem [shape: f32[1,32], index: 14, kind: input, shape index: {}]
  %s15 = inlined_call_operand.vmem [shape: bf16[32,32], index: 15, kind: input, shape index: {}]
  %s16 = inlined_call_operand.vmem [shape: f32[1,32], index: 16, kind: input, shape index: {}]
  %s17 = inlined_call_operand.hbm [shape: f32[16,32], index: 17, kind: output, shape index: {}]
  %s18 = sld [smem:[#allocation0]]
  $region78: #{tpu_custom_call.1} parent=0
    _
  %s20 = ssub.s32 1, %s18
  %s21 = scalar_select 0, %s20, %s18
  $region1: #{tpu_custom_call.1} parent=0
    #allocation2 [shape = 'u8[8192]{0}', space=vmem, size = 0x2000, scoped, tag = 'output window, operand 0, single buffered']
    #allocation3 [shape = 's32[1]{0}', space=sflag, size = 0x4, scoped, tag = 'scoped memory for tpu_custom_call.1']
    %22 = vsyncpa [#allocation3], 0
    // Predicated region
    $region2: #{tpu_custom_call.1} parent=1 // pred_check
      _
    $region3: #{tpu_custom_call.1} parent=1 // pred_check_branch
      %24 = sbr.rel (0) target = $region5
    $region4: #{tpu_custom_call.1} parent=1 // pred_region
      _
    $region5: #{tpu_custom_call.1} parent=1 // pred_fallthru
      _
    // Predicated region
    $region6: #{tpu_custom_call.1} parent=1 // pred_check
      _
    $region7: #{tpu_custom_call.1} parent=1 // pred_check_branch
      %26 = sbr.rel (0) target = $region9
    $region8: #{tpu_custom_call.1} parent=1 // pred_region
      _
    $region9: #{tpu_custom_call.1} parent=1 // pred_fallthru
      _
    // Predicated region
    $region10: #{tpu_custom_call.1} parent=1 // pred_check
      _
    $region11: #{tpu_custom_call.1} parent=1 // pred_check_branch
      %28 = sbr.rel (0) target = $region13
    $region12: #{tpu_custom_call.1} parent=1 // pred_region
      _
    $region13: #{tpu_custom_call.1} parent=1 // pred_fallthru
      _
    // Predicated region
    $region14: #{tpu_custom_call.1} parent=1 // pred_check
      _
    $region15: #{tpu_custom_call.1} parent=1 // pred_check_branch
      %30 = sbr.rel (0) target = $region17
    $region16: #{tpu_custom_call.1} parent=1 // pred_region
      _
    $region17: #{tpu_custom_call.1} parent=1 // pred_fallthru
      _
    // Predicated region
    $region18: #{tpu_custom_call.1} parent=1 // pred_check
      _
    $region19: #{tpu_custom_call.1} parent=1 // pred_check_branch
      %32 = sbr.rel (0) target = $region21
    $region20: #{tpu_custom_call.1} parent=1 // pred_region
      _
    $region21: #{tpu_custom_call.1} parent=1 // pred_fallthru
      _
    // Predicated region
    $region22: #{tpu_custom_call.1} parent=1 // pred_check
      _
    $region23: #{tpu_custom_call.1} parent=1 // pred_check_branch
      %34 = sbr.rel (0) target = $region25
    $region24: #{tpu_custom_call.1} parent=1 // pred_region
      _
    $region25: #{tpu_custom_call.1} parent=1 // pred_fallthru
      _
    // Predicated region
    $region26: #{tpu_custom_call.1} parent=1 // pred_check
      _
    $region27: #{tpu_custom_call.1} parent=1 // pred_check_branch
      %36 = sbr.rel (0) target = $region29
    $region28: #{tpu_custom_call.1} parent=1 // pred_region
      _
    $region29: #{tpu_custom_call.1} parent=1 // pred_fallthru
      _
    // Predicated region
    $region30: #{tpu_custom_call.1} parent=1 // pred_check
      _
    $region31: #{tpu_custom_call.1} parent=1 // pred_check_branch
      %38 = sbr.rel (0) target = $region33
    $region32: #{tpu_custom_call.1} parent=1 // pred_region
      _
    $region33: #{tpu_custom_call.1} parent=1 // pred_fallthru
      _
    // Predicated region
    $region34: #{tpu_custom_call.1} parent=1 // pred_check
      _
    $region35: #{tpu_custom_call.1} parent=1 // pred_check_branch
      %40 = sbr.rel (0) target = $region37
    $region36: #{tpu_custom_call.1} parent=1 // pred_region
      _
    $region37: #{tpu_custom_call.1} parent=1 // pred_fallthru
      _
    // Predicated region
    $region38: #{tpu_custom_call.1} parent=1 // pred_check
      _
    $region39: #{tpu_custom_call.1} parent=1 // pred_check_branch
      %42 = sbr.rel (0) target = $region41
    $region40: #{tpu_custom_call.1} parent=1 // pred_region
      _
    $region41: #{tpu_custom_call.1} parent=1 // pred_fallthru
      _
    // Predicated region
    $region42: #{tpu_custom_call.1} parent=1 // pred_check
      _
    $region43: #{tpu_custom_call.1} parent=1 // pred_check_branch
      %44 = sbr.rel (0) target = $region45
    $region44: #{tpu_custom_call.1} parent=1 // pred_region
      _
    $region45: #{tpu_custom_call.1} parent=1 // pred_fallthru
      _
    // Predicated region
    $region46: #{tpu_custom_call.1} parent=1 // pred_check
      _
    $region47: #{tpu_custom_call.1} parent=1 // pred_check_branch
      %46 = sbr.rel (0) target = $region49
    $region48: #{tpu_custom_call.1} parent=1 // pred_region
      _
    $region49: #{tpu_custom_call.1} parent=1 // pred_fallthru
      _
    // Predicated region
    $region50: #{tpu_custom_call.1} parent=1 // pred_check
      _
    $region51: #{tpu_custom_call.1} parent=1 // pred_check_branch
      %48 = sbr.rel (0) target = $region53
    $region52: #{tpu_custom_call.1} parent=1 // pred_region
      _
    $region53: #{tpu_custom_call.1} parent=1 // pred_fallthru
      _
    // Predicated region
    $region54: #{tpu_custom_call.1} parent=1 // pred_check
      _
    $region55: #{tpu_custom_call.1} parent=1 // pred_check_branch
      %50 = sbr.rel (0) target = $region57
    $region56: #{tpu_custom_call.1} parent=1 // pred_region
      _
    $region57: #{tpu_custom_call.1} parent=1 // pred_fallthru
      _
    // Predicated region
    $region58: #{tpu_custom_call.1} parent=1 // pred_check
      _
    $region59: #{tpu_custom_call.1} parent=1 // pred_check_branch
      %52 = sbr.rel (0) target = $region61
    $region60: #{tpu_custom_call.1} parent=1 // pred_region
      _
    $region61: #{tpu_custom_call.1} parent=1 // pred_fallthru
      _
    // Predicated region
    $region62: #{tpu_custom_call.1} parent=1 // pred_check
      _
    $region63: #{tpu_custom_call.1} parent=1 // pred_check_branch
      %54 = sbr.rel (0) target = $region65
    $region64: #{tpu_custom_call.1} parent=1 // pred_region
      _
    $region65: #{tpu_custom_call.1} parent=1 // pred_fallthru
      _
    // Predicated region
    $region66: #{tpu_custom_call.1} parent=1 // pred_check
      _
    $region67: #{tpu_custom_call.1} parent=1 // pred_check_branch
      %56 = sbr.rel (0) target = $region69
    $region68: #{tpu_custom_call.1} parent=1 // pred_region
      _
    $region69: #{tpu_custom_call.1} parent=1 // pred_fallthru
      _
    %v58 = vld [vmem:[%s0] sm:$0xff]
    %v59 = vld [vmem:[%s0 + $0x8] sm:$0xff]
    %v60 = vld [vmem:[%s1] sm:$0xff]
    %v61 = vld [vmem:[%s1 + $0x8] sm:$0xff]
    %v62 = vld [vmem:[%s1 + $0x10] sm:$0xff]
    %v63 = vld [vmem:[%s1 + $0x18] sm:$0xff]
    %v64 = vld [vmem:[%s2] sm:$0x3]
    %v65 = vld [vmem:[%s3] sm:$0x1]
    %v66 = vld [vmem:[%s4] sm:$0x1]
    %vm67 = vcmask 261120
    %v68 = vsel %vm67, %v58, 0.0
    %69 = vadd.xlane.f32.xlu0 %v68
    %v70 = vpop.xlane.xlu0 %69
    %v71 = vsel %vm67, %v59, 0.0
    %72 = vadd.xlane.f32.xlu0 %v71
    %v73 = vpop.xlane.xlu0 %72
    %v74 = vrcp.pop 32.0
    %v75 = vmul.f32 %v70, %v74
    %v76 = vmul.f32 %v73, %v74
    %v77 = vsub.f32 %v58, %v75
    %v78 = vsub.f32 %v59, %v76
    %v79 = vmul.f32 %v77, %v77
    %v80 = vmul.f32 %v78, %v78
    %v81 = vsel %vm67, %v79, 0.0
    %82 = vadd.xlane.f32.xlu0 %v81
    %v83 = vpop.xlane.xlu0 %82
    %v84 = vsel %vm67, %v80, 0.0
    %85 = vadd.xlane.f32.xlu0 %v84
    %v86 = vpop.xlane.xlu0 %85
    %v87 = vmul.f32 %v83, %v74
    %v88 = vmul.f32 %v86, %v74
    %v89 = vadd.f32 %v87, 1e-05
    %v90 = vadd.f32 %v88, 1e-05
    %v91 = vrsqrt.pop %v89
    %v92 = vrsqrt.pop %v90
    %v93 = vmul.f32 %v77, %v91
    %v94 = vmul.f32 %v78, %v92
    %v96 = vlaneseq
    %v97 = vshrl.u32 %v96, 7
    %v98 = vsub.s32 0, %v97
    %v99 = vrot.slane %v65, %v98
    %v101 = vmul.f32 %v93, %v99
    %v102 = vmul.f32 %v94, %v99
    %v104 = vlaneseq
    %v105 = vshrl.u32 %v104, 7
    %v106 = vsub.s32 0, %v105
    %v107 = vrot.slane %v66, %v106
    %v109 = vadd.f32 %v101, %v107
    %v110 = vadd.f32 %v102, %v107
    %v111 = vld [vmem:[%s5] sm:$0x1]
    %v112 = vld [vmem:[%s6] sm:$0x1]
    %v113 = vsel %vm67, %v60, 0.0
    %114 = vadd.xlane.f32.xlu0 %v113
    %v115 = vpop.xlane.xlu0 %114
    %v116 = vsel %vm67, %v61, 0.0
    %117 = vadd.xlane.f32.xlu0 %v116
    %v118 = vpop.xlane.xlu0 %117
    %v119 = vsel %vm67, %v62, 0.0
    %120 = vadd.xlane.f32.xlu0 %v119
    %v121 = vpop.xlane.xlu0 %120
    %v122 = vsel %vm67, %v63, 0.0
    %123 = vadd.xlane.f32.xlu0 %v122
    %v124 = vpop.xlane.xlu0 %123
    %v125 = vmul.f32 %v115, %v74
    %v126 = vmul.f32 %v118, %v74
    %v127 = vmul.f32 %v121, %v74
    %v128 = vmul.f32 %v124, %v74
    %v129 = vsub.f32 %v60, %v125
    %v130 = vsub.f32 %v61, %v126
    %v131 = vsub.f32 %v62, %v127
    %v132 = vsub.f32 %v63, %v128
    %v133 = vmul.f32 %v129, %v129
    %v134 = vmul.f32 %v130, %v130
    %v135 = vmul.f32 %v131, %v131
    %v136 = vmul.f32 %v132, %v132
    %v137 = vsel %vm67, %v133, 0.0
    %138 = vadd.xlane.f32.xlu0 %v137
    %v139 = vpop.xlane.xlu0 %138
    %v140 = vsel %vm67, %v134, 0.0
    %141 = vadd.xlane.f32.xlu0 %v140
    %v142 = vpop.xlane.xlu0 %141
    %v143 = vsel %vm67, %v135, 0.0
    %144 = vadd.xlane.f32.xlu0 %v143
    %v145 = vpop.xlane.xlu0 %144
    %v146 = vsel %vm67, %v136, 0.0
    %147 = vadd.xlane.f32.xlu0 %v146
    %v148 = vpop.xlane.xlu0 %147
    %v149 = vmul.f32 %v139, %v74
    %v150 = vmul.f32 %v142, %v74
    %v151 = vmul.f32 %v145, %v74
    %v152 = vmul.f32 %v148, %v74
    %v153 = vadd.f32 %v149, 1e-05
    %v154 = vadd.f32 %v150, 1e-05
    %v155 = vadd.f32 %v151, 1e-05
    %v156 = vadd.f32 %v152, 1e-05
    %v157 = vrsqrt.pop %v153
    %v158 = vrsqrt.pop %v154
    %v159 = vrsqrt.pop %v155
    %v160 = vrsqrt.pop %v156
    %v161 = vmul.f32 %v129, %v157
    %v162 = vmul.f32 %v130, %v158
    %v163 = vmul.f32 %v131, %v159
    %v164 = vmul.f32 %v132, %v160
    %v166 = vlaneseq
    %v167 = vshrl.u32 %v166, 7
    %v168 = vsub.s32 0, %v167
    %v169 = vrot.slane %v111, %v168
    %v171 = vmul.f32 %v161, %v169
    %v172 = vmul.f32 %v162, %v169
    %v173 = vmul.f32 %v163, %v169
    %v174 = vmul.f32 %v164, %v169
    %v176 = vlaneseq
    %v177 = vshrl.u32 %v176, 7
    %v178 = vsub.s32 0, %v177
    %v179 = vrot.slane %v112, %v178
    %v181 = vadd.f32 %v171, %v179
    %v182 = vadd.f32 %v172, %v179
    %v183 = vadd.f32 %v173, %v179
    %v184 = vadd.f32 %v174, %v179
    %v185 = vpack.c.bf16 %v110, %v109
    %v186 = vpack.c.bf16 %v182, %v181
    %v187 = vpack.c.bf16 %v184, %v183
    %v188 = vld [vmem:[%s7] sm:$0xf]
    %v189 = vld [vmem:[%s7 + $0x4] sm:$0xf]
    %v190 = vld [vmem:[%s7 + $0x8] sm:$0xf]
    %v191 = vld [vmem:[%s7 + $0xc] sm:$0xf]
    %v192 = vld [vmem:[%s7 + $0x10] sm:$0xf]
    %v193 = vld [vmem:[%s7 + $0x14] sm:$0xf]
    %v194 = vld [vmem:[%s7 + $0x18] sm:$0xf]
    %v195 = vld [vmem:[%s7 + $0x1c] sm:$0xf]
    %v196 = vld [vmem:[%s7 + $0x20] sm:$0xf]
    %v197 = vld [vmem:[%s7 + $0x24] sm:$0xf]
    %v198 = vld [vmem:[%s7 + $0x28] sm:$0xf]
    %v199 = vld [vmem:[%s7 + $0x2c] sm:$0xf]
    %v200 = vld [vmem:[%s7 + $0x30] sm:$0xf]
    %v201 = vld [vmem:[%s7 + $0x34] sm:$0xf]
    %v202 = vld [vmem:[%s7 + $0x38] sm:$0xf]
    %v203 = vld [vmem:[%s7 + $0x3c] sm:$0xf]
    %v204 = vld [vmem:[%s8] sm:$0xf]
    %v205 = vld [vmem:[%s8 + $0x4] sm:$0xf]
    %v206 = vld [vmem:[%s8 + $0x8] sm:$0xf]
    %v207 = vld [vmem:[%s8 + $0xc] sm:$0xf]
    %v208 = vld [vmem:[%s8 + $0x10] sm:$0xf]
    %v209 = vld [vmem:[%s8 + $0x14] sm:$0xf]
    %v210 = vld [vmem:[%s8 + $0x18] sm:$0xf]
    %v211 = vld [vmem:[%s8 + $0x1c] sm:$0xf]
    %v212 = vld [vmem:[%s8 + $0x20] sm:$0xf]
    %v213 = vld [vmem:[%s8 + $0x24] sm:$0xf]
    %v214 = vld [vmem:[%s8 + $0x28] sm:$0xf]
    %v215 = vld [vmem:[%s8 + $0x2c] sm:$0xf]
    %v216 = vld [vmem:[%s8 + $0x30] sm:$0xf]
    %v217 = vld [vmem:[%s8 + $0x34] sm:$0xf]
    %v218 = vld [vmem:[%s8 + $0x38] sm:$0xf]
    %v219 = vld [vmem:[%s8 + $0x3c] sm:$0xf]
    %v220 = vld [vmem:[%s8 + $0x40] sm:$0xf]
    %v221 = vld [vmem:[%s8 + $0x44] sm:$0xf]
    %v222 = vld [vmem:[%s8 + $0x48] sm:$0xf]
    %v223 = vld [vmem:[%s8 + $0x4c] sm:$0xf]
    %v224 = vld [vmem:[%s8 + $0x50] sm:$0xf]
    %v225 = vld [vmem:[%s8 + $0x54] sm:$0xf]
    %v226 = vld [vmem:[%s8 + $0x58] sm:$0xf]
    %v227 = vld [vmem:[%s8 + $0x5c] sm:$0xf]
    %v228 = vld [vmem:[%s8 + $0x60] sm:$0xf]
    %v229 = vld [vmem:[%s8 + $0x64] sm:$0xf]
    %v230 = vld [vmem:[%s8 + $0x68] sm:$0xf]
    %v231 = vld [vmem:[%s8 + $0x6c] sm:$0xf]
    %v232 = vld [vmem:[%s8 + $0x70] sm:$0xf]
    %v233 = vld [vmem:[%s8 + $0x74] sm:$0xf]
    %v234 = vld [vmem:[%s8 + $0x78] sm:$0xf]
    %v235 = vld [vmem:[%s8 + $0x7c] sm:$0xf]
    %v236 = vld [vmem:[%s9] sm:$0xf]
    %v237 = vld [vmem:[%s9 + $0x4] sm:$0xf]
    %v238 = vld [vmem:[%s9 + $0x8] sm:$0xf]
    %v239 = vld [vmem:[%s9 + $0xc] sm:$0xf]
    %v240 = vld [vmem:[%s9 + $0x10] sm:$0xf]
    %v241 = vld [vmem:[%s9 + $0x14] sm:$0xf]
    %v242 = vld [vmem:[%s9 + $0x18] sm:$0xf]
    %v243 = vld [vmem:[%s9 + $0x1c] sm:$0xf]
    %v248 = vunpack.c.l.b16 %v188
    %v249 = vunpack.c.l.b16 %v189
    %v250 = vunpack.c.l.b16 %v190
    %v251 = vunpack.c.l.b16 %v191
    %v252 = vpack.c.b16 %v249, %v248
    %v253 = vpack.c.b16 %v251, %v250
    %v257 = vsel %vm67, %v185, 0
    %259 = vmatprep.subr.bf16.mxu0 0
    %260 = vmatpush1.bf16.msra.mxu0 %v252
    %261 = vmatprep.subr.bf16.mxu0 0
    %262 = vmatpush1.bf16.msra.mxu0 %v253
    %263 = vmatprep.subr.bf16.mxu0 0
    %264 = vmatpush1.bf16.msra.mxu0 0
    %265 = vmatprep.subr.bf16.mxu0 0
    %266 = vmatpush1.bf16.msra.mxu0 0
    %267 = vmatprep.subr.bf16.mxu0 0
    %268 = vmatpush1.bf16.msra.mxu0 0
    %269 = vmatprep.subr.bf16.mxu0 0
    %270 = vmatpush1.bf16.msra.mxu0 0
    %271 = vmatprep.subr.bf16.mxu0 0
    %272 = vmatpush1.bf16.msra.mxu0 0
    %273 = vmatprep.subr.bf16.mxu0 0
    %274 = vmatpush1.bf16.msra.mxu0 0
    %275 = vmatprep.subr.bf16.mxu0 0
    %276 = vmatpush1.bf16.msra.mxu0 0
    %277 = vmatprep.subr.bf16.mxu0 0
    %278 = vmatpush1.bf16.msra.mxu0 0
    %279 = vmatprep.subr.bf16.mxu0 0
    %280 = vmatpush1.bf16.msra.mxu0 0
    %281 = vmatprep.subr.bf16.mxu0 0
    %282 = vmatpush1.bf16.msra.mxu0 0
    %283 = vmatprep.subr.bf16.mxu0 0
    %284 = vmatpush1.bf16.msra.mxu0 0
    %285 = vmatprep.subr.bf16.mxu0 0
    %286 = vmatpush1.bf16.msra.mxu0 0
    %287 = vmatprep.subr.bf16.mxu0 0
    %288 = vmatpush1.bf16.msra.mxu0 0
    %289 = vmatprep.subr.bf16.mxu0 0
    %290 = vmatpush1.bf16.msra.mxu0 0
    %291 = vmatprep.mubr.bf16.mxu0 0
    %292 = vmatmul.mubr.bf16.gmra.mrb[0].mxu0 %v257
    %v293 = vpop.f32.mrb[0].mxu0
    %v294 = vadd.f32 0.0, %v293
    %v295 = vpop.f32.mrb[0].mxu0
    %v296 = vpop.f32.mrb[0].mxu0
    %v297 = vadd.f32 0.0, %v296
    %v298 = vpop.f32.mrb[0].mxu0
    %299 = vdwg.mxu0
    %v304 = vunpack.c.l.b16 %v192
    %v305 = vunpack.c.l.b16 %v193
    %v306 = vunpack.c.l.b16 %v194
    %v307 = vunpack.c.l.b16 %v195
    %v308 = vpack.c.b16 %v305, %v304
    %v309 = vpack.c.b16 %v307, %v306
    %312 = vmatprep.subr.bf16.mxu0 0
    %313 = vmatpush1.bf16.msra.mxu0 %v308
    %314 = vmatprep.subr.bf16.mxu0 0
    %315 = vmatpush1.bf16.msra.mxu0 %v309
    %316 = vmatprep.subr.bf16.mxu0 0
    %317 = vmatpush1.bf16.msra.mxu0 0
    %318 = vmatprep.subr.bf16.mxu0 0
    %319 = vmatpush1.bf16.msra.mxu0 0
    %320 = vmatprep.subr.bf16.mxu0 0
    %321 = vmatpush1.bf16.msra.mxu0 0
    %322 = vmatprep.subr.bf16.mxu0 0
    %323 = vmatpush1.bf16.msra.mxu0 0
    %324 = vmatprep.subr.bf16.mxu0 0
    %325 = vmatpush1.bf16.msra.mxu0 0
    %326 = vmatprep.subr.bf16.mxu0 0
    %327 = vmatpush1.bf16.msra.mxu0 0
    %328 = vmatprep.subr.bf16.mxu0 0
    %329 = vmatpush1.bf16.msra.mxu0 0
    %330 = vmatprep.subr.bf16.mxu0 0
    %331 = vmatpush1.bf16.msra.mxu0 0
    %332 = vmatprep.subr.bf16.mxu0 0
    %333 = vmatpush1.bf16.msra.mxu0 0
    %334 = vmatprep.subr.bf16.mxu0 0
    %335 = vmatpush1.bf16.msra.mxu0 0
    %336 = vmatprep.subr.bf16.mxu0 0
    %337 = vmatpush1.bf16.msra.mxu0 0
    %338 = vmatprep.subr.bf16.mxu0 0
    %339 = vmatpush1.bf16.msra.mxu0 0
    %340 = vmatprep.subr.bf16.mxu0 0
    %341 = vmatpush1.bf16.msra.mxu0 0
    %342 = vmatprep.subr.bf16.mxu0 0
    %343 = vmatpush1.bf16.msra.mxu0 0
    %344 = vmatprep.mubr.bf16.mxu0 0
    %345 = vmatmul.mubr.bf16.gmra.mrb[0].mxu0 %v257
    %v346 = vpop.f32.mrb[0].mxu0
    %v347 = vadd.f32 0.0, %v346
    %v348 = vpop.f32.mrb[0].mxu0
    %v349 = vpop.f32.mrb[0].mxu0
    %v350 = vadd.f32 0.0, %v349
    %v351 = vpop.f32.mrb[0].mxu0
    %352 = vdwg.mxu0
    %v357 = vunpack.c.l.b16 %v196
    %v358 = vunpack.c.l.b16 %v197
    %v359 = vunpack.c.l.b16 %v198
    %v360 = vunpack.c.l.b16 %v199
    %v361 = vpack.c.b16 %v358, %v357
    %v362 = vpack.c.b16 %v360, %v359
    %365 = vmatprep.subr.bf16.mxu0 0
    %366 = vmatpush1.bf16.msra.mxu0 %v361
    %367 = vmatprep.subr.bf16.mxu0 0
    %368 = vmatpush1.bf16.msra.mxu0 %v362
    %369 = vmatprep.subr.bf16.mxu0 0
    %370 = vmatpush1.bf16.msra.mxu0 0
    %371 = vmatprep.subr.bf16.mxu0 0
    %372 = vmatpush1.bf16.msra.mxu0 0
    %373 = vmatprep.subr.bf16.mxu0 0
    %374 = vmatpush1.bf16.msra.mxu0 0
    %375 = vmatprep.subr.bf16.mxu0 0
    %376 = vmatpush1.bf16.msra.mxu0 0
    %377 = vmatprep.subr.bf16.mxu0 0
    %378 = vmatpush1.bf16.msra.mxu0 0
    %379 = vmatprep.subr.bf16.mxu0 0
    %380 = vmatpush1.bf16.msra.mxu0 0
    %381 = vmatprep.subr.bf16.mxu0 0
    %382 = vmatpush1.bf16.msra.mxu0 0
    %383 = vmatprep.subr.bf16.mxu0 0
    %384 = vmatpush1.bf16.msra.mxu0 0
    %385 = vmatprep.subr.bf16.mxu0 0
    %386 = vmatpush1.bf16.msra.mxu0 0
    %387 = vmatprep.subr.bf16.mxu0 0
    %388 = vmatpush1.bf16.msra.mxu0 0
    %389 = vmatprep.subr.bf16.mxu0 0
    %390 = vmatpush1.bf16.msra.mxu0 0
    %391 = vmatprep.subr.bf16.mxu0 0
    %392 = vmatpush1.bf16.msra.mxu0 0
    %393 = vmatprep.subr.bf16.mxu0 0
    %394 = vmatpush1.bf16.msra.mxu0 0
    %395 = vmatprep.subr.bf16.mxu0 0
    %396 = vmatpush1.bf16.msra.mxu0 0
    %397 = vmatprep.mubr.bf16.mxu0 0
    %398 = vmatmul.mubr.bf16.gmra.mrb[0].mxu0 %v257
    %v399 = vpop.f32.mrb[0].mxu0
    %v400 = vadd.f32 0.0, %v399
    %v401 = vpop.f32.mrb[0].mxu0
    %v402 = vpop.f32.mrb[0].mxu0
    %v403 = vadd.f32 0.0, %v402
    %v404 = vpop.f32.mrb[0].mxu0
    %405 = vdwg.mxu0
    %v410 = vunpack.c.l.b16 %v200
    %v411 = vunpack.c.l.b16 %v201
    %v412 = vunpack.c.l.b16 %v202
    %v413 = vunpack.c.l.b16 %v203
    %v414 = vpack.c.b16 %v411, %v410
    %v415 = vpack.c.b16 %v413, %v412
    %418 = vmatprep.subr.bf16.mxu0 0
    %419 = vmatpush1.bf16.msra.mxu0 %v414
    %420 = vmatprep.subr.bf16.mxu0 0
    %421 = vmatpush1.bf16.msra.mxu0 %v415
    %422 = vmatprep.subr.bf16.mxu0 0
    %423 = vmatpush1.bf16.msra.mxu0 0
    %424 = vmatprep.subr.bf16.mxu0 0
    %425 = vmatpush1.bf16.msra.mxu0 0
    %426 = vmatprep.subr.bf16.mxu0 0
    %427 = vmatpush1.bf16.msra.mxu0 0
    %428 = vmatprep.subr.bf16.mxu0 0
    %429 = vmatpush1.bf16.msra.mxu0 0
    %430 = vmatprep.subr.bf16.mxu0 0
    %431 = vmatpush1.bf16.msra.mxu0 0
    %432 = vmatprep.subr.bf16.mxu0 0
    %433 = vmatpush1.bf16.msra.mxu0 0
    %434 = vmatprep.subr.bf16.mxu0 0
    %435 = vmatpush1.bf16.msra.mxu0 0
    %436 = vmatprep.subr.bf16.mxu0 0
    %437 = vmatpush1.bf16.msra.mxu0 0
    %438 = vmatprep.subr.bf16.mxu0 0
    %439 = vmatpush1.bf16.msra.mxu0 0
    %440 = vmatprep.subr.bf16.mxu0 0
    %441 = vmatpush1.bf16.msra.mxu0 0
    %442 = vmatprep.subr.bf16.mxu0 0
    %443 = vmatpush1.bf16.msra.mxu0 0
    %444 = vmatprep.subr.bf16.mxu0 0
    %445 = vmatpush1.bf16.msra.mxu0 0
    %446 = vmatprep.subr.bf16.mxu0 0
    %447 = vmatpush1.bf16.msra.mxu0 0
    %448 = vmatprep.subr.bf16.mxu0 0
    %449 = vmatpush1.bf16.msra.mxu0 0
    %450 = vmatprep.mubr.bf16.mxu0 0
    %451 = vmatmul.mubr.bf16.gmra.mrb[0].mxu0 %v257
    %v452 = vpop.f32.mrb[0].mxu0
    %v453 = vadd.f32 0.0, %v452
    %v454 = vpop.f32.mrb[0].mxu0
    %v455 = vpop.f32.mrb[0].mxu0
    %v456 = vadd.f32 0.0, %v455
    %v457 = vpop.f32.mrb[0].mxu0
    %458 = vdwg.mxu0
    %v459 = vpack.c.bf16 %v297, %v294
    %v460 = vpack.c.bf16 %v350, %v347
    %v461 = vpack.c.bf16 %v403, %v400
    %v462 = vpack.c.bf16 %v456, %v453
    %v467 = vunpack.c.l.b16 %v204
    %v468 = vunpack.c.l.b16 %v205
    %v469 = vunpack.c.l.b16 %v206
    %v470 = vunpack.c.l.b16 %v207
    %v471 = vpack.c.b16 %v468, %v467
    %v472 = vpack.c.b16 %v470, %v469
    %v476 = vsel %vm67, %v186, 0
    %v479 = vsel %vm67, %v187, 0
    %481 = vmatprep.subr.bf16.mxu0 0
    %482 = vmatpush1.bf16.msra.mxu0 %v471
    %483 = vmatprep.subr.bf16.mxu0 0
    %484 = vmatpush1.bf16.msra.mxu0 %v472
    %485 = vmatprep.subr.bf16.mxu0 0
    %486 = vmatpush1.bf16.msra.mxu0 0
    %487 = vmatprep.subr.bf16.mxu0 0
    %488 = vmatpush1.bf16.msra.mxu0 0
    %489 = vmatprep.subr.bf16.mxu0 0
    %490 = vmatpush1.bf16.msra.mxu0 0
    %491 = vmatprep.subr.bf16.mxu0 0
    %492 = vmatpush1.bf16.msra.mxu0 0
    %493 = vmatprep.subr.bf16.mxu0 0
    %494 = vmatpush1.bf16.msra.mxu0 0
    %495 = vmatprep.subr.bf16.mxu0 0
    %496 = vmatpush1.bf16.msra.mxu0 0
    %497 = vmatprep.subr.bf16.mxu0 0
    %498 = vmatpush1.bf16.msra.mxu0 0
    %499 = vmatprep.subr.bf16.mxu0 0
    %500 = vmatpush1.bf16.msra.mxu0 0
    %501 = vmatprep.subr.bf16.mxu0 0
    %502 = vmatpush1.bf16.msra.mxu0 0
    %503 = vmatprep.subr.bf16.mxu0 0
    %504 = vmatpush1.bf16.msra.mxu0 0
    %505 = vmatprep.subr.bf16.mxu0 0
    %506 = vmatpush1.bf16.msra.mxu0 0
    %507 = vmatprep.subr.bf16.mxu0 0
    %508 = vmatpush1.bf16.msra.mxu0 0
    %509 = vmatprep.subr.bf16.mxu0 0
    %510 = vmatpush1.bf16.msra.mxu0 0
    %511 = vmatprep.subr.bf16.mxu0 0
    %512 = vmatpush1.bf16.msra.mxu0 0
    %513 = vmatprep.mubr.bf16.mxu0 0
    %514 = vmatmul.mubr.bf16.gmra.mrb[0].mxu0 %v476
    %v515 = vpop.f32.mrb[0].mxu0
    %v516 = vadd.f32 0.0, %v515
    %v517 = vpop.f32.mrb[0].mxu0
    %v518 = vpop.f32.mrb[0].mxu0
    %v519 = vadd.f32 0.0, %v518
    %v520 = vpop.f32.mrb[0].mxu0
    %521 = vmatprep.mubr.bf16.mxu0 0
    %522 = vmatmul.mubr.bf16.gmra.mrb[0].mxu0 %v479
    %v523 = vpop.f32.mrb[0].mxu0
    %v524 = vadd.f32 0.0, %v523
    %v525 = vpop.f32.mrb[0].mxu0
    %v526 = vpop.f32.mrb[0].mxu0
    %v527 = vadd.f32 0.0, %v526
    %v528 = vpop.f32.mrb[0].mxu0
    %529 = vdwg.mxu0
    %v534 = vunpack.c.l.b16 %v208
    %v535 = vunpack.c.l.b16 %v209
    %v536 = vunpack.c.l.b16 %v210
    %v537 = vunpack.c.l.b16 %v211
    %v538 = vpack.c.b16 %v535, %v534
    %v539 = vpack.c.b16 %v537, %v536
    %542 = vmatprep.subr.bf16.mxu0 0
    %543 = vmatpush1.bf16.msra.mxu0 %v538
    %544 = vmatprep.subr.bf16.mxu0 0
    %545 = vmatpush1.bf16.msra.mxu0 %v539
    %546 = vmatprep.subr.bf16.mxu0 0
    %547 = vmatpush1.bf16.msra.mxu0 0
    %548 = vmatprep.subr.bf16.mxu0 0
    %549 = vmatpush1.bf16.msra.mxu0 0
    %550 = vmatprep.subr.bf16.mxu0 0
    %551 = vmatpush1.bf16.msra.mxu0 0
    %552 = vmatprep.subr.bf16.mxu0 0
    %553 = vmatpush1.bf16.msra.mxu0 0
    %554 = vmatprep.subr.bf16.mxu0 0
    %555 = vmatpush1.bf16.msra.mxu0 0
    %556 = vmatprep.subr.bf16.mxu0 0
    %557 = vmatpush1.bf16.msra.mxu0 0
    %558 = vmatprep.subr.bf16.mxu0 0
    %559 = vmatpush1.bf16.msra.mxu0 0
    %560 = vmatprep.subr.bf16.mxu0 0
    %561 = vmatpush1.bf16.msra.mxu0 0
    %562 = vmatprep.subr.bf16.mxu0 0
    %563 = vmatpush1.bf16.msra.mxu0 0
    %564 = vmatprep.subr.bf16.mxu0 0
    %565 = vmatpush1.bf16.msra.mxu0 0
    %566 = vmatprep.subr.bf16.mxu0 0
    %567 = vmatpush1.bf16.msra.mxu0 0
    %568 = vmatprep.subr.bf16.mxu0 0
    %569 = vmatpush1.bf16.msra.mxu0 0
    %570 = vmatprep.subr.bf16.mxu0 0
    %571 = vmatpush1.bf16.msra.mxu0 0
    %572 = vmatprep.subr.bf16.mxu0 0
    %573 = vmatpush1.bf16.msra.mxu0 0
    %574 = vmatprep.mubr.bf16.mxu0 0
    %575 = vmatmul.mubr.bf16.gmra.mrb[0].mxu0 %v476
    %v576 = vpop.f32.mrb[0].mxu0
    %v577 = vadd.f32 0.0, %v576
    %v578 = vpop.f32.mrb[0].mxu0
    %v579 = vpop.f32.mrb[0].mxu0
    %v580 = vadd.f32 0.0, %v579
    %v581 = vpop.f32.mrb[0].mxu0
    %582 = vmatprep.mubr.bf16.mxu0 0
    %583 = vmatmul.mubr.bf16.gmra.mrb[0].mxu0 %v479
    %v584 = vpop.f32.mrb[0].mxu0
    %v585 = vadd.f32 0.0, %v584
    %v586 = vpop.f32.mrb[0].mxu0
    %v587 = vpop.f32.mrb[0].mxu0
    %v588 = vadd.f32 0.0, %v587
    %v589 = vpop.f32.mrb[0].mxu0
    %590 = vdwg.mxu0
    %v595 = vunpack.c.l.b16 %v212
    %v596 = vunpack.c.l.b16 %v213
    %v597 = vunpack.c.l.b16 %v214
    %v598 = vunpack.c.l.b16 %v215
    %v599 = vpack.c.b16 %v596, %v595
    %v600 = vpack.c.b16 %v598, %v597
    %603 = vmatprep.subr.bf16.mxu0 0
    %604 = vmatpush1.bf16.msra.mxu0 %v599
    %605 = vmatprep.subr.bf16.mxu0 0
    %606 = vmatpush1.bf16.msra.mxu0 %v600
    %607 = vmatprep.subr.bf16.mxu0 0
    %608 = vmatpush1.bf16.msra.mxu0 0
    %609 = vmatprep.subr.bf16.mxu0 0
    %610 = vmatpush1.bf16.msra.mxu0 0
    %611 = vmatprep.subr.bf16.mxu0 0
    %612 = vmatpush1.bf16.msra.mxu0 0
    %613 = vmatprep.subr.bf16.mxu0 0
    %614 = vmatpush1.bf16.msra.mxu0 0
    %615 = vmatprep.subr.bf16.mxu0 0
    %616 = vmatpush1.bf16.msra.mxu0 0
    %617 = vmatprep.subr.bf16.mxu0 0
    %618 = vmatpush1.bf16.msra.mxu0 0
    %619 = vmatprep.subr.bf16.mxu0 0
    %620 = vmatpush1.bf16.msra.mxu0 0
    %621 = vmatprep.subr.bf16.mxu0 0
    %622 = vmatpush1.bf16.msra.mxu0 0
    %623 = vmatprep.subr.bf16.mxu0 0
    %624 = vmatpush1.bf16.msra.mxu0 0
    %625 = vmatprep.subr.bf16.mxu0 0
    %626 = vmatpush1.bf16.msra.mxu0 0
    %627 = vmatprep.subr.bf16.mxu0 0
    %628 = vmatpush1.bf16.msra.mxu0 0
    %629 = vmatprep.subr.bf16.mxu0 0
    %630 = vmatpush1.bf16.msra.mxu0 0
    %631 = vmatprep.subr.bf16.mxu0 0
    %632 = vmatpush1.bf16.msra.mxu0 0
    %633 = vmatprep.subr.bf16.mxu0 0
    %634 = vmatpush1.bf16.msra.mxu0 0
    %635 = vmatprep.mubr.bf16.mxu0 0
    %636 = vmatmul.mubr.bf16.gmra.mrb[0].mxu0 %v476
    %v637 = vpop.f32.mrb[0].mxu0
    %v638 = vadd.f32 0.0, %v637
    %v639 = vpop.f32.mrb[0].mxu0
    %v640 = vpop.f32.mrb[0].mxu0
    %v641 = vadd.f32 0.0, %v640
    %v642 = vpop.f32.mrb[0].mxu0
    %643 = vmatprep.mubr.bf16.mxu0 0
    %644 = vmatmul.mubr.bf16.gmra.mrb[0].mxu0 %v479
    %v645 = vpop.f32.mrb[0].mxu0
    %v646 = vadd.f32 0.0, %v645
    %v647 = vpop.f32.mrb[0].mxu0
    %v648 = vpop.f32.mrb[0].mxu0
    %v649 = vadd.f32 0.0, %v648
    %v650 = vpop.f32.mrb[0].mxu0
    %651 = vdwg.mxu0
    %v656 = vunpack.c.l.b16 %v216
    %v657 = vunpack.c.l.b16 %v217
    %v658 = vunpack.c.l.b16 %v218
    %v659 = vunpack.c.l.b16 %v219
    %v660 = vpack.c.b16 %v657, %v656
    %v661 = vpack.c.b16 %v659, %v658
    %664 = vmatprep.subr.bf16.mxu0 0
    %665 = vmatpush1.bf16.msra.mxu0 %v660
    %666 = vmatprep.subr.bf16.mxu0 0
    %667 = vmatpush1.bf16.msra.mxu0 %v661
    %668 = vmatprep.subr.bf16.mxu0 0
    %669 = vmatpush1.bf16.msra.mxu0 0
    %670 = vmatprep.subr.bf16.mxu0 0
    %671 = vmatpush1.bf16.msra.mxu0 0
    %672 = vmatprep.subr.bf16.mxu0 0
    %673 = vmatpush1.bf16.msra.mxu0 0
    %674 = vmatprep.subr.bf16.mxu0 0
    %675 = vmatpush1.bf16.msra.mxu0 0
    %676 = vmatprep.subr.bf16.mxu0 0
    %677 = vmatpush1.bf16.msra.mxu0 0
    %678 = vmatprep.subr.bf16.mxu0 0
    %679 = vmatpush1.bf16.msra.mxu0 0
    %680 = vmatprep.subr.bf16.mxu0 0
    %681 = vmatpush1.bf16.msra.mxu0 0
    %682 = vmatprep.subr.bf16.mxu0 0
    %683 = vmatpush1.bf16.msra.mxu0 0
    %684 = vmatprep.subr.bf16.mxu0 0
    %685 = vmatpush1.bf16.msra.mxu0 0
    %686 = vmatprep.subr.bf16.mxu0 0
    %687 = vmatpush1.bf16.msra.mxu0 0
    %688 = vmatprep.subr.bf16.mxu0 0
    %689 = vmatpush1.bf16.msra.mxu0 0
    %690 = vmatprep.subr.bf16.mxu0 0
    %691 = vmatpush1.bf16.msra.mxu0 0
    %692 = vmatprep.subr.bf16.mxu0 0
    %693 = vmatpush1.bf16.msra.mxu0 0
    %694 = vmatprep.subr.bf16.mxu0 0
    %695 = vmatpush1.bf16.msra.mxu0 0
    %696 = vmatprep.mubr.bf16.mxu0 0
    %697 = vmatmul.mubr.bf16.gmra.mrb[0].mxu0 %v476
    %v698 = vpop.f32.mrb[0].mxu0
    %v699 = vadd.f32 0.0, %v698
    %v700 = vpop.f32.mrb[0].mxu0
    %v701 = vpop.f32.mrb[0].mxu0
    %v702 = vadd.f32 0.0, %v701
    %v703 = vpop.f32.mrb[0].mxu0
    %704 = vmatprep.mubr.bf16.mxu0 0
    %705 = vmatmul.mubr.bf16.gmra.mrb[0].mxu0 %v479
    %v706 = vpop.f32.mrb[0].mxu0
    %v707 = vadd.f32 0.0, %v706
    %v708 = vpop.f32.mrb[0].mxu0
    %v709 = vpop.f32.mrb[0].mxu0
    %v710 = vadd.f32 0.0, %v709
    %v711 = vpop.f32.mrb[0].mxu0
    %712 = vdwg.mxu0
    %v717 = vunpack.c.l.b16 %v220
    %v718 = vunpack.c.l.b16 %v221
    %v719 = vunpack.c.l.b16 %v222
    %v720 = vunpack.c.l.b16 %v223
    %v721 = vpack.c.b16 %v718, %v717
    %v722 = vpack.c.b16 %v720, %v719
    %725 = vmatprep.subr.bf16.mxu0 0
    %726 = vmatpush1.bf16.msra.mxu0 %v721
    %727 = vmatprep.subr.bf16.mxu0 0
    %728 = vmatpush1.bf16.msra.mxu0 %v722
    %729 = vmatprep.subr.bf16.mxu0 0
    %730 = vmatpush1.bf16.msra.mxu0 0
    %731 = vmatprep.subr.bf16.mxu0 0
    %732 = vmatpush1.bf16.msra.mxu0 0
    %733 = vmatprep.subr.bf16.mxu0 0
    %734 = vmatpush1.bf16.msra.mxu0 0
    %735 = vmatprep.subr.bf16.mxu0 0
    %736 = vmatpush1.bf16.msra.mxu0 0
    %737 = vmatprep.subr.bf16.mxu0 0
    %738 = vmatpush1.bf16.msra.mxu0 0
    %739 = vmatprep.subr.bf16.mxu0 0
    %740 = vmatpush1.bf16.msra.mxu0 0
    %741 = vmatprep.subr.bf16.mxu0 0
    %742 = vmatpush1.bf16.msra.mxu0 0
    %743 = vmatprep.subr.bf16.mxu0 0
    %744 = vmatpush1.bf16.msra.mxu0 0
    %745 = vmatprep.subr.bf16.mxu0 0
    %746 = vmatpush1.bf16.msra.mxu0 0
    %747 = vmatprep.subr.bf16.mxu0 0
    %748 = vmatpush1.bf16.msra.mxu0 0
    %749 = vmatprep.subr.bf16.mxu0 0
    %750 = vmatpush1.bf16.msra.mxu0 0
    %751 = vmatprep.subr.bf16.mxu0 0
    %752 = vmatpush1.bf16.msra.mxu0 0
    %753 = vmatprep.subr.bf16.mxu0 0
    %754 = vmatpush1.bf16.msra.mxu0 0
    %755 = vmatprep.subr.bf16.mxu0 0
    %756 = vmatpush1.bf16.msra.mxu0 0
    %757 = vmatprep.mubr.bf16.mxu0 0
    %758 = vmatmul.mubr.bf16.gmra.mrb[0].mxu0 %v476
    %v759 = vpop.f32.mrb[0].mxu0
    %v760 = vadd.f32 0.0, %v759
    %v761 = vpop.f32.mrb[0].mxu0
    %v762 = vpop.f32.mrb[0].mxu0
    %v763 = vadd.f32 0.0, %v762
    %v764 = vpop.f32.mrb[0].mxu0
    %765 = vmatprep.mubr.bf16.mxu0 0
    %766 = vmatmul.mubr.bf16.gmra.mrb[0].mxu0 %v479
    %v767 = vpop.f32.mrb[0].mxu0
    %v768 = vadd.f32 0.0, %v767
    %v769 = vpop.f32.mrb[0].mxu0
    %v770 = vpop.f32.mrb[0].mxu0
    %v771 = vadd.f32 0.0, %v770
    %v772 = vpop.f32.mrb[0].mxu0
    %773 = vdwg.mxu0
    %v778 = vunpack.c.l.b16 %v224
    %v779 = vunpack.c.l.b16 %v225
    %v780 = vunpack.c.l.b16 %v226
    %v781 = vunpack.c.l.b16 %v227
    %v782 = vpack.c.b16 %v779, %v778
    %v783 = vpack.c.b16 %v781, %v780
    %786 = vmatprep.subr.bf16.mxu0 0
    %787 = vmatpush1.bf16.msra.mxu0 %v782
    %788 = vmatprep.subr.bf16.mxu0 0
    %789 = vmatpush1.bf16.msra.mxu0 %v783
    %790 = vmatprep.subr.bf16.mxu0 0
    %791 = vmatpush1.bf16.msra.mxu0 0
    %792 = vmatprep.subr.bf16.mxu0 0
    %793 = vmatpush1.bf16.msra.mxu0 0
    %794 = vmatprep.subr.bf16.mxu0 0
    %795 = vmatpush1.bf16.msra.mxu0 0
    %796 = vmatprep.subr.bf16.mxu0 0
    %797 = vmatpush1.bf16.msra.mxu0 0
    %798 = vmatprep.subr.bf16.mxu0 0
    %799 = vmatpush1.bf16.msra.mxu0 0
    %800 = vmatprep.subr.bf16.mxu0 0
    %801 = vmatpush1.bf16.msra.mxu0 0
    %802 = vmatprep.subr.bf16.mxu0 0
    %803 = vmatpush1.bf16.msra.mxu0 0
    %804 = vmatprep.subr.bf16.mxu0 0
    %805 = vmatpush1.bf16.msra.mxu0 0
    %806 = vmatprep.subr.bf16.mxu0 0
    %807 = vmatpush1.bf16.msra.mxu0 0
    %808 = vmatprep.subr.bf16.mxu0 0
    %809 = vmatpush1.bf16.msra.mxu0 0
    %810 = vmatprep.subr.bf16.mxu0 0
    %811 = vmatpush1.bf16.msra.mxu0 0
    %812 = vmatprep.subr.bf16.mxu0 0
    %813 = vmatpush1.bf16.msra.mxu0 0
    %814 = vmatprep.subr.bf16.mxu0 0
    %815 = vmatpush1.bf16.msra.mxu0 0
    %816 = vmatprep.subr.bf16.mxu0 0
    %817 = vmatpush1.bf16.msra.mxu0 0
    %818 = vmatprep.mubr.bf16.mxu0 0
    %819 = vmatmul.mubr.bf16.gmra.mrb[0].mxu0 %v476
    %v820 = vpop.f32.mrb[0].mxu0
    %v821 = vadd.f32 0.0, %v820
    %v822 = vpop.f32.mrb[0].mxu0
    %v823 = vpop.f32.mrb[0].mxu0
    %v824 = vadd.f32 0.0, %v823
    %v825 = vpop.f32.mrb[0].mxu0
    %826 = vmatprep.mubr.bf16.mxu0 0
    %827 = vmatmul.mubr.bf16.gmra.mrb[0].mxu0 %v479
    %v828 = vpop.f32.mrb[0].mxu0
    %v829 = vadd.f32 0.0, %v828
    %v830 = vpop.f32.mrb[0].mxu0
    %v831 = vpop.f32.mrb[0].mxu0
    %v832 = vadd.f32 0.0, %v831
    %v833 = vpop.f32.mrb[0].mxu0
    %834 = vdwg.mxu0
    %v839 = vunpack.c.l.b16 %v228
    %v840 = vunpack.c.l.b16 %v229
    %v841 = vunpack.c.l.b16 %v230
    %v842 = vunpack.c.l.b16 %v231
    %v843 = vpack.c.b16 %v840, %v839
    %v844 = vpack.c.b16 %v842, %v841
    %847 = vmatprep.subr.bf16.mxu0 0
    %848 = vmatpush1.bf16.msra.mxu0 %v843
    %849 = vmatprep.subr.bf16.mxu0 0
    %850 = vmatpush1.bf16.msra.mxu0 %v844
    %851 = vmatprep.subr.bf16.mxu0 0
    %852 = vmatpush1.bf16.msra.mxu0 0
    %853 = vmatprep.subr.bf16.mxu0 0
    %854 = vmatpush1.bf16.msra.mxu0 0
    %855 = vmatprep.subr.bf16.mxu0 0
    %856 = vmatpush1.bf16.msra.mxu0 0
    %857 = vmatprep.subr.bf16.mxu0 0
    %858 = vmatpush1.bf16.msra.mxu0 0
    %859 = vmatprep.subr.bf16.mxu0 0
    %860 = vmatpush1.bf16.msra.mxu0 0
    %861 = vmatprep.subr.bf16.mxu0 0
    %862 = vmatpush1.bf16.msra.mxu0 0
    %863 = vmatprep.subr.bf16.mxu0 0
    %864 = vmatpush1.bf16.msra.mxu0 0
    %865 = vmatprep.subr.bf16.mxu0 0
    %866 = vmatpush1.bf16.msra.mxu0 0
    %867 = vmatprep.subr.bf16.mxu0 0
    %868 = vmatpush1.bf16.msra.mxu0 0
    %869 = vmatprep.subr.bf16.mxu0 0
    %870 = vmatpush1.bf16.msra.mxu0 0
    %871 = vmatprep.subr.bf16.mxu0 0
    %872 = vmatpush1.bf16.msra.mxu0 0
    %873 = vmatprep.subr.bf16.mxu0 0
    %874 = vmatpush1.bf16.msra.mxu0 0
    %875 = vmatprep.subr.bf16.mxu0 0
    %876 = vmatpush1.bf16.msra.mxu0 0
    %877 = vmatprep.subr.bf16.mxu0 0
    %878 = vmatpush1.bf16.msra.mxu0 0
    %879 = vmatprep.mubr.bf16.mxu0 0
    %880 = vmatmul.mubr.bf16.gmra.mrb[0].mxu0 %v476
    %v881 = vpop.f32.mrb[0].mxu0
    %v882 = vadd.f32 0.0, %v881
    %v883 = vpop.f32.mrb[0].mxu0
    %v884 = vpop.f32.mrb[0].mxu0
    %v885 = vadd.f32 0.0, %v884
    %v886 = vpop.f32.mrb[0].mxu0
    %887 = vmatprep.mubr.bf16.mxu0 0
    %888 = vmatmul.mubr.bf16.gmra.mrb[0].mxu0 %v479
    %v889 = vpop.f32.mrb[0].mxu0
    %v890 = vadd.f32 0.0, %v889
    %v891 = vpop.f32.mrb[0].mxu0
    %v892 = vpop.f32.mrb[0].mxu0
    %v893 = vadd.f32 0.0, %v892
    %v894 = vpop.f32.mrb[0].mxu0
    %895 = vdwg.mxu0
    %v900 = vunpack.c.l.b16 %v232
    %v901 = vunpack.c.l.b16 %v233
    %v902 = vunpack.c.l.b16 %v234
    %v903 = vunpack.c.l.b16 %v235
    %v904 = vpack.c.b16 %v901, %v900
    %v905 = vpack.c.b16 %v903, %v902
    %908 = vmatprep.subr.bf16.mxu0 0
    %909 = vmatpush1.bf16.msra.mxu0 %v904
    %910 = vmatprep.subr.bf16.mxu0 0
    %911 = vmatpush1.bf16.msra.mxu0 %v905
    %912 = vmatprep.subr.bf16.mxu0 0
    %913 = vmatpush1.bf16.msra.mxu0 0
    %914 = vmatprep.subr.bf16.mxu0 0
    %915 = vmatpush1.bf16.msra.mxu0 0
    %916 = vmatprep.subr.bf16.mxu0 0
    %917 = vmatpush1.bf16.msra.mxu0 0
    %918 = vmatprep.subr.bf16.mxu0 0
    %919 = vmatpush1.bf16.msra.mxu0 0
    %920 = vmatprep.subr.bf16.mxu0 0
    %921 = vmatpush1.bf16.msra.mxu0 0
    %922 = vmatprep.subr.bf16.mxu0 0
    %923 = vmatpush1.bf16.msra.mxu0 0
    %924 = vmatprep.subr.bf16.mxu0 0
    %925 = vmatpush1.bf16.msra.mxu0 0
    %926 = vmatprep.subr.bf16.mxu0 0
    %927 = vmatpush1.bf16.msra.mxu0 0
    %928 = vmatprep.subr.bf16.mxu0 0
    %929 = vmatpush1.bf16.msra.mxu0 0
    %930 = vmatprep.subr.bf16.mxu0 0
    %931 = vmatpush1.bf16.msra.mxu0 0
    %932 = vmatprep.subr.bf16.mxu0 0
    %933 = vmatpush1.bf16.msra.mxu0 0
    %934 = vmatprep.subr.bf16.mxu0 0
    %935 = vmatpush1.bf16.msra.mxu0 0
    %936 = vmatprep.subr.bf16.mxu0 0
    %937 = vmatpush1.bf16.msra.mxu0 0
    %938 = vmatprep.subr.bf16.mxu0 0
    %939 = vmatpush1.bf16.msra.mxu0 0
    %940 = vmatprep.mubr.bf16.mxu0 0
    %941 = vmatmul.mubr.bf16.gmra.mrb[0].mxu0 %v476
    %v942 = vpop.f32.mrb[0].mxu0
    %v943 = vadd.f32 0.0, %v942
    %v944 = vpop.f32.mrb[0].mxu0
    %v945 = vpop.f32.mrb[0].mxu0
    %v946 = vadd.f32 0.0, %v945
    %v947 = vpop.f32.mrb[0].mxu0
    %948 = vmatprep.mubr.bf16.mxu0 0
    %949 = vmatmul.mubr.bf16.gmra.mrb[0].mxu0 %v479
    %v950 = vpop.f32.mrb[0].mxu0
    %v951 = vadd.f32 0.0, %v950
    %v952 = vpop.f32.mrb[0].mxu0
    %v953 = vpop.f32.mrb[0].mxu0
    %v954 = vadd.f32 0.0, %v953
    %v955 = vpop.f32.mrb[0].mxu0
    %956 = vdwg.mxu0
    %v957 = vpack.c.bf16 %v519, %v516
    %v958 = vpack.c.bf16 %v527, %v524
    %v959 = vpack.c.bf16 %v580, %v577
    %v960 = vpack.c.bf16 %v588, %v585
    %v961 = vpack.c.bf16 %v641, %v638
    %v962 = vpack.c.bf16 %v649, %v646
    %v963 = vpack.c.bf16 %v702, %v699
    %v964 = vpack.c.bf16 %v710, %v707
    %v965 = vpack.c.bf16 %v763, %v760
    %v966 = vpack.c.bf16 %v771, %v768
    %v967 = vpack.c.bf16 %v824, %v821
    %v968 = vpack.c.bf16 %v832, %v829
    %v969 = vpack.c.bf16 %v885, %v882
    %v970 = vpack.c.bf16 %v893, %v890
    %v971 = vpack.c.bf16 %v946, %v943
    %v972 = vpack.c.bf16 %v954, %v951
    %v973 = vlaneseq
    %v974 = vshrl.u32 %v973, 7
    %v975 = vsub.s32 0, %v974
    %v976 = vrot.slane %v64, %v975
    %vm977 = vcmask 130048
    %v979 = vsel %vm977, %v459, 0
    %v982 = vsel %vm977, %v957, 0
    %984 = vmatprep.subr.bf16.mxu0 0
    %985 = vmatpush1.bf16.xpose.msra.mxu0 %v982
    %986 = vmatprep.subr.bf16.mxu0 0
    %987 = vmatpush1.bf16.xpose.msra.mxu0 0
    %988 = vmatprep.subr.bf16.mxu0 0
    %989 = vmatpush1.bf16.xpose.msra.mxu0 0
    %990 = vmatprep.subr.bf16.mxu0 0
    %991 = vmatpush1.bf16.xpose.msra.mxu0 0
    %992 = vmatprep.subr.bf16.mxu0 0
    %993 = vmatpush1.bf16.xpose.msra.mxu0 0
    %994 = vmatprep.subr.bf16.mxu0 0
    %995 = vmatpush1.bf16.xpose.msra.mxu0 0
    %996 = vmatprep.subr.bf16.mxu0 0
    %997 = vmatpush1.bf16.xpose.msra.mxu0 0
    %998 = vmatprep.subr.bf16.mxu0 0
    %999 = vmatpush1.bf16.xpose.msra.mxu0 0
    %1000 = vmatprep.subr.bf16.mxu0 0
    %1001 = vmatpush1.bf16.xpose.msra.mxu0 0
    %1002 = vmatprep.subr.bf16.mxu0 0
    %1003 = vmatpush1.bf16.xpose.msra.mxu0 0
    %1004 = vmatprep.subr.bf16.mxu0 0
    %1005 = vmatpush1.bf16.xpose.msra.mxu0 0
    %1006 = vmatprep.subr.bf16.mxu0 0
    %1007 = vmatpush1.bf16.xpose.msra.mxu0 0
    %1008 = vmatprep.subr.bf16.mxu0 0
    %1009 = vmatpush1.bf16.xpose.msra.mxu0 0
    %1010 = vmatprep.subr.bf16.mxu0 0
    %1011 = vmatpush1.bf16.xpose.msra.mxu0 0
    %1012 = vmatprep.subr.bf16.mxu0 0
    %1013 = vmatpush1.bf16.xpose.msra.mxu0 0
    %1014 = vmatprep.subr.bf16.mxu0 0
    %1015 = vmatpush1.bf16.xpose.msra.mxu0 0
    %1016 = vmatprep.mubr.bf16.mxu0 0
    %1017 = vmatmul.mubr.bf16.gmra.mrb[0].mxu0 %v979
    %v1018 = vpop.f32.mrb[0].mxu0
    %v1019 = vadd.f32 %v976, %v1018
    %v1020 = vpop.f32.mrb[0].mxu0
    %v1021 = vpop.f32.mrb[0].mxu0
    %v1022 = vpop.f32.mrb[0].mxu0
    %1023 = vdwg.mxu0
    %v1025 = vsel %vm977, %v460, 0
    %v1028 = vsel %vm977, %v959, 0
    %1030 = vmatprep.subr.bf16.mxu0 0
    %1031 = vmatpush1.bf16.xpose.msra.mxu0 %v1028
    %1032 = vmatprep.subr.bf16.mxu0 0
    %1033 = vmatpush1.bf16.xpose.msra.mxu0 0
    %1034 = vmatprep.subr.bf16.mxu0 0
    %1035 = vmatpush1.bf16.xpose.msra.mxu0 0
    %1036 = vmatprep.subr.bf16.mxu0 0
    %1037 = vmatpush1.bf16.xpose.msra.mxu0 0
    %1038 = vmatprep.subr.bf16.mxu0 0
    %1039 = vmatpush1.bf16.xpose.msra.mxu0 0
    %1040 = vmatprep.subr.bf16.mxu0 0
    %1041 = vmatpush1.bf16.xpose.msra.mxu0 0
    %1042 = vmatprep.subr.bf16.mxu0 0
    %1043 = vmatpush1.bf16.xpose.msra.mxu0 0
    %1044 = vmatprep.subr.bf16.mxu0 0
    %1045 = vmatpush1.bf16.xpose.msra.mxu0 0
    %1046 = vmatprep.subr.bf16.mxu0 0
    %1047 = vmatpush1.bf16.xpose.msra.mxu0 0
    %1048 = vmatprep.subr.bf16.mxu0 0
    %1049 = vmatpush1.bf16.xpose.msra.mxu0 0
    %1050 = vmatprep.subr.bf16.mxu0 0
    %1051 = vmatpush1.bf16.xpose.msra.mxu0 0
    %1052 = vmatprep.subr.bf16.mxu0 0
    %1053 = vmatpush1.bf16.xpose.msra.mxu0 0
    %1054 = vmatprep.subr.bf16.mxu0 0
    %1055 = vmatpush1.bf16.xpose.msra.mxu0 0
    %1056 = vmatprep.subr.bf16.mxu0 0
    %1057 = vmatpush1.bf16.xpose.msra.mxu0 0
    %1058 = vmatprep.subr.bf16.mxu0 0
    %1059 = vmatpush1.bf16.xpose.msra.mxu0 0
    %1060 = vmatprep.subr.bf16.mxu0 0
    %1061 = vmatpush1.bf16.xpose.msra.mxu0 0
    %1062 = vmatprep.mubr.bf16.mxu0 0
    %1063 = vmatmul.mubr.bf16.gmra.mrb[0].mxu0 %v1025
    %v1064 = vpop.f32.mrb[0].mxu0
    %v1065 = vadd.f32 %v976, %v1064
    %v1066 = vpop.f32.mrb[0].mxu0
    %v1067 = vpop.f32.mrb[0].mxu0
    %v1068 = vpop.f32.mrb[0].mxu0
    %1069 = vdwg.mxu0
    %v1071 = vsel %vm977, %v461, 0
    %v1074 = vsel %vm977, %v961, 0
    %1076 = vmatprep.subr.bf16.mxu0 0
    %1077 = vmatpush1.bf16.xpose.msra.mxu0 %v1074
    %1078 = vmatprep.subr.bf16.mxu0 0
    %1079 = vmatpush1.bf16.xpose.msra.mxu0 0
    %1080 = vmatprep.subr.bf16.mxu0 0
    %1081 = vmatpush1.bf16.xpose.msra.mxu0 0
    %1082 = vmatprep.subr.bf16.mxu0 0
    %1083 = vmatpush1.bf16.xpose.msra.mxu0 0
    %1084 = vmatprep.subr.bf16.mxu0 0
    %1085 = vmatpush1.bf16.xpose.msra.mxu0 0
    %1086 = vmatprep.subr.bf16.mxu0 0
    %1087 = vmatpush1.bf16.xpose.msra.mxu0 0
    %1088 = vmatprep.subr.bf16.mxu0 0
    %1089 = vmatpush1.bf16.xpose.msra.mxu0 0
    %1090 = vmatprep.subr.bf16.mxu0 0
    %1091 = vmatpush1.bf16.xpose.msra.mxu0 0
    %1092 = vmatprep.subr.bf16.mxu0 0
    %1093 = vmatpush1.bf16.xpose.msra.mxu0 0
    %1094 = vmatprep.subr.bf16.mxu0 0
    %1095 = vmatpush1.bf16.xpose.msra.mxu0 0
    %1096 = vmatprep.subr.bf16.mxu0 0
    %1097 = vmatpush1.bf16.xpose.msra.mxu0 0
    %1098 = vmatprep.subr.bf16.mxu0 0
    %1099 = vmatpush1.bf16.xpose.msra.mxu0 0
    %1100 = vmatprep.subr.bf16.mxu0 0
    %1101 = vmatpush1.bf16.xpose.msra.mxu0 0
    %1102 = vmatprep.subr.bf16.mxu0 0
    %1103 = vmatpush1.bf16.xpose.msra.mxu0 0
    %1104 = vmatprep.subr.bf16.mxu0 0
    %1105 = vmatpush1.bf16.xpose.msra.mxu0 0
    %1106 = vmatprep.subr.bf16.mxu0 0
    %1107 = vmatpush1.bf16.xpose.msra.mxu0 0
    %1108 = vmatprep.mubr.bf16.mxu0 0
    %1109 = vmatmul.mubr.bf16.gmra.mrb[0].mxu0 %v1071
    %v1110 = vpop.f32.mrb[0].mxu0
    %v1111 = vadd.f32 %v976, %v1110
    %v1112 = vpop.f32.mrb[0].mxu0
    %v1113 = vpop.f32.mrb[0].mxu0
    %v1114 = vpop.f32.mrb[0].mxu0
    %1115 = vdwg.mxu0
    %v1117 = vsel %vm977, %v462, 0
    %v1120 = vsel %vm977, %v963, 0
    %1122 = vmatprep.subr.bf16.mxu0 0
    %1123 = vmatpush1.bf16.xpose.msra.mxu0 %v1120
    %1124 = vmatprep.subr.bf16.mxu0 0
    %1125 = vmatpush1.bf16.xpose.msra.mxu0 0
    %1126 = vmatprep.subr.bf16.mxu0 0
    %1127 = vmatpush1.bf16.xpose.msra.mxu0 0
    %1128 = vmatprep.subr.bf16.mxu0 0
    %1129 = vmatpush1.bf16.xpose.msra.mxu0 0
    %1130 = vmatprep.subr.bf16.mxu0 0
    %1131 = vmatpush1.bf16.xpose.msra.mxu0 0
    %1132 = vmatprep.subr.bf16.mxu0 0
    %1133 = vmatpush1.bf16.xpose.msra.mxu0 0
    %1134 = vmatprep.subr.bf16.mxu0 0
    %1135 = vmatpush1.bf16.xpose.msra.mxu0 0
    %1136 = vmatprep.subr.bf16.mxu0 0
    %1137 = vmatpush1.bf16.xpose.msra.mxu0 0
    %1138 = vmatprep.subr.bf16.mxu0 0
    %1139 = vmatpush1.bf16.xpose.msra.mxu0 0
    %1140 = vmatprep.subr.bf16.mxu0 0
    %1141 = vmatpush1.bf16.xpose.msra.mxu0 0
    %1142 = vmatprep.subr.bf16.mxu0 0
    %1143 = vmatpush1.bf16.xpose.msra.mxu0 0
    %1144 = vmatprep.subr.bf16.mxu0 0
    %1145 = vmatpush1.bf16.xpose.msra.mxu0 0
    %1146 = vmatprep.subr.bf16.mxu0 0
    %1147 = vmatpush1.bf16.xpose.msra.mxu0 0
    %1148 = vmatprep.subr.bf16.mxu0 0
    %1149 = vmatpush1.bf16.xpose.msra.mxu0 0
    %1150 = vmatprep.subr.bf16.mxu0 0
    %1151 = vmatpush1.bf16.xpose.msra.mxu0 0
    %1152 = vmatprep.subr.bf16.mxu0 0
    %1153 = vmatpush1.bf16.xpose.msra.mxu0 0
    %1154 = vmatprep.mubr.bf16.mxu0 0
    %1155 = vmatmul.mubr.bf16.gmra.mrb[0].mxu0 %v1117
    %v1156 = vpop.f32.mrb[0].mxu0
    %v1157 = vadd.f32 %v976, %v1156
    %v1158 = vpop.f32.mrb[0].mxu0
    %v1159 = vpop.f32.mrb[0].mxu0
    %v1160 = vpop.f32.mrb[0].mxu0
    %1161 = vdwg.mxu0
    %v1162 = vsel %vm977, %v1019, -inf
    %1163 = vmax.xlane.f32.xlu0 %v1162
    %v1164 = vpop.xlane.xlu0 %1163
    %v1165 = vsel %vm977, %v1065, -inf
    %1166 = vmax.xlane.f32.xlu0 %v1165
    %v1167 = vpop.xlane.xlu0 %1166
    %v1168 = vsel %vm977, %v1111, -inf
    %1169 = vmax.xlane.f32.xlu0 %v1168
    %v1170 = vpop.xlane.xlu0 %1169
    %v1171 = vsel %vm977, %v1157, -inf
    %1172 = vmax.xlane.f32.xlu0 %v1171
    %v1173 = vpop.xlane.xlu0 %1172
    %v1174 = vsub.f32 %v1019, %v1164
    %v1175 = vsub.f32 %v1065, %v1167
    %v1176 = vsub.f32 %v1111, %v1170
    %v1177 = vsub.f32 %v1157, %v1173
    %v1178 = vmul.f32 %v1174, 1.442695
    %v1179 = vpow.pop %v1178
    %v1180 = vmul.f32 %v1175, 1.442695
    %v1181 = vpow.pop %v1180
    %v1182 = vmul.f32 %v1176, 1.442695
    %v1183 = vpow.pop %v1182
    %v1184 = vmul.f32 %v1177, 1.442695
    %v1185 = vpow.pop %v1184
    %v1186 = vsel %vm977, %v1179, 0.0
    %1187 = vadd.xlane.f32.xlu0 %v1186
    %v1188 = vpop.xlane.xlu0 %1187
    %v1189 = vsel %vm977, %v1181, 0.0
    %1190 = vadd.xlane.f32.xlu0 %v1189
    %v1191 = vpop.xlane.xlu0 %1190
    %v1192 = vsel %vm977, %v1183, 0.0
    %1193 = vadd.xlane.f32.xlu0 %v1192
    %v1194 = vpop.xlane.xlu0 %1193
    %v1195 = vsel %vm977, %v1185, 0.0
    %1196 = vadd.xlane.f32.xlu0 %v1195
    %v1197 = vpop.xlane.xlu0 %1196
    %v1198 = vrcp.pop %v1188
    %v1199 = vrcp.pop %v1191
    %v1200 = vrcp.pop %v1194
    %v1201 = vrcp.pop %v1197
    %v1202 = vmul.f32 %v1179, %v1198
    %v1203 = vmul.f32 %v1181, %v1199
    %v1204 = vmul.f32 %v1183, %v1200
    %v1205 = vmul.f32 %v1185, %v1201
    %v1206 = vpack.c.bf16 %v1202, %v1202
    %v1207 = vpack.c.bf16 %v1203, %v1203
    %v1208 = vpack.c.bf16 %v1204, %v1204
    %v1209 = vpack.c.bf16 %v1205, %v1205
    %v1211 = vsel %vm977, %v1206, 0
    %1213 = vmatprep.subr.bf16.mxu0 0
    %1214 = vmatpush1.bf16.msra.mxu0 %v965
    %1215 = vmatprep.subr.bf16.mxu0 0
    %1216 = vmatpush1.bf16.msra.mxu0 0
    %1217 = vmatprep.subr.bf16.mxu0 0
    %1218 = vmatpush1.bf16.msra.mxu0 0
    %1219 = vmatprep.subr.bf16.mxu0 0
    %1220 = vmatpush1.bf16.msra.mxu0 0
    %1221 = vmatprep.subr.bf16.mxu0 0
    %1222 = vmatpush1.bf16.msra.mxu0 0
    %1223 = vmatprep.subr.bf16.mxu0 0
    %1224 = vmatpush1.bf16.msra.mxu0 0
    %1225 = vmatprep.subr.bf16.mxu0 0
    %1226 = vmatpush1.bf16.msra.mxu0 0
    %1227 = vmatprep.subr.bf16.mxu0 0
    %1228 = vmatpush1.bf16.msra.mxu0 0
    %1229 = vmatprep.subr.bf16.mxu0 0
    %1230 = vmatpush1.bf16.msra.mxu0 0
    %1231 = vmatprep.subr.bf16.mxu0 0
    %1232 = vmatpush1.bf16.msra.mxu0 0
    %1233 = vmatprep.subr.bf16.mxu0 0
    %1234 = vmatpush1.bf16.msra.mxu0 0
    %1235 = vmatprep.subr.bf16.mxu0 0
    %1236 = vmatpush1.bf16.msra.mxu0 0
    %1237 = vmatprep.subr.bf16.mxu0 0
    %1238 = vmatpush1.bf16.msra.mxu0 0
    %1239 = vmatprep.subr.bf16.mxu0 0
    %1240 = vmatpush1.bf16.msra.mxu0 0
    %1241 = vmatprep.subr.bf16.mxu0 0
    %1242 = vmatpush1.bf16.msra.mxu0 0
    %1243 = vmatprep.subr.bf16.mxu0 0
    %1244 = vmatpush1.bf16.msra.mxu0 0
    %1245 = vmatprep.mubr.bf16.mxu0 0
    %1246 = vmatmul.mubr.bf16.gmra.mrb[0].mxu0 %v1211
    %v1247 = vpop.f32.mrb[0].mxu0
    %v1248 = vadd.f32 0.0, %v1247
    %v1249 = vpop.f32.mrb[0].mxu0
    %v1250 = vpop.f32.mrb[0].mxu0
    %v1251 = vpop.f32.mrb[0].mxu0
    %1252 = vdwg.mxu0
    %v1254 = vsel %vm977, %v1207, 0
    %1256 = vmatprep.subr.bf16.mxu0 0
    %1257 = vmatpush1.bf16.msra.mxu0 %v967
    %1258 = vmatprep.subr.bf16.mxu0 0
    %1259 = vmatpush1.bf16.msra.mxu0 0
    %1260 = vmatprep.subr.bf16.mxu0 0
    %1261 = vmatpush1.bf16.msra.mxu0 0
    %1262 = vmatprep.subr.bf16.mxu0 0
    %1263 = vmatpush1.bf16.msra.mxu0 0
    %1264 = vmatprep.subr.bf16.mxu0 0
    %1265 = vmatpush1.bf16.msra.mxu0 0
    %1266 = vmatprep.subr.bf16.mxu0 0
    %1267 = vmatpush1.bf16.msra.mxu0 0
    %1268 = vmatprep.subr.bf16.mxu0 0
    %1269 = vmatpush1.bf16.msra.mxu0 0
    %1270 = vmatprep.subr.bf16.mxu0 0
    %1271 = vmatpush1.bf16.msra.mxu0 0
    %1272 = vmatprep.subr.bf16.mxu0 0
    %1273 = vmatpush1.bf16.msra.mxu0 0
    %1274 = vmatprep.subr.bf16.mxu0 0
    %1275 = vmatpush1.bf16.msra.mxu0 0
    %1276 = vmatprep.subr.bf16.mxu0 0
    %1277 = vmatpush1.bf16.msra.mxu0 0
    %1278 = vmatprep.subr.bf16.mxu0 0
    %1279 = vmatpush1.bf16.msra.mxu0 0
    %1280 = vmatprep.subr.bf16.mxu0 0
    %1281 = vmatpush1.bf16.msra.mxu0 0
    %1282 = vmatprep.subr.bf16.mxu0 0
    %1283 = vmatpush1.bf16.msra.mxu0 0
    %1284 = vmatprep.subr.bf16.mxu0 0
    %1285 = vmatpush1.bf16.msra.mxu0 0
    %1286 = vmatprep.subr.bf16.mxu0 0
    %1287 = vmatpush1.bf16.msra.mxu0 0
    %1288 = vmatprep.mubr.bf16.mxu0 0
    %1289 = vmatmul.mubr.bf16.gmra.mrb[0].mxu0 %v1254
    %v1290 = vpop.f32.mrb[0].mxu0
    %v1291 = vadd.f32 0.0, %v1290
    %v1292 = vpop.f32.mrb[0].mxu0
    %v1293 = vpop.f32.mrb[0].mxu0
    %v1294 = vpop.f32.mrb[0].mxu0
    %1295 = vdwg.mxu0
    %v1297 = vsel %vm977, %v1208, 0
    %1299 = vmatprep.subr.bf16.mxu0 0
    %1300 = vmatpush1.bf16.msra.mxu0 %v969
    %1301 = vmatprep.subr.bf16.mxu0 0
    %1302 = vmatpush1.bf16.msra.mxu0 0
    %1303 = vmatprep.subr.bf16.mxu0 0
    %1304 = vmatpush1.bf16.msra.mxu0 0
    %1305 = vmatprep.subr.bf16.mxu0 0
    %1306 = vmatpush1.bf16.msra.mxu0 0
    %1307 = vmatprep.subr.bf16.mxu0 0
    %1308 = vmatpush1.bf16.msra.mxu0 0
    %1309 = vmatprep.subr.bf16.mxu0 0
    %1310 = vmatpush1.bf16.msra.mxu0 0
    %1311 = vmatprep.subr.bf16.mxu0 0
    %1312 = vmatpush1.bf16.msra.mxu0 0
    %1313 = vmatprep.subr.bf16.mxu0 0
    %1314 = vmatpush1.bf16.msra.mxu0 0
    %1315 = vmatprep.subr.bf16.mxu0 0
    %1316 = vmatpush1.bf16.msra.mxu0 0
    %1317 = vmatprep.subr.bf16.mxu0 0
    %1318 = vmatpush1.bf16.msra.mxu0 0
    %1319 = vmatprep.subr.bf16.mxu0 0
    %1320 = vmatpush1.bf16.msra.mxu0 0
    %1321 = vmatprep.subr.bf16.mxu0 0
    %1322 = vmatpush1.bf16.msra.mxu0 0
    %1323 = vmatprep.subr.bf16.mxu0 0
    %1324 = vmatpush1.bf16.msra.mxu0 0
    %1325 = vmatprep.subr.bf16.mxu0 0
    %1326 = vmatpush1.bf16.msra.mxu0 0
    %1327 = vmatprep.subr.bf16.mxu0 0
    %1328 = vmatpush1.bf16.msra.mxu0 0
    %1329 = vmatprep.subr.bf16.mxu0 0
    %1330 = vmatpush1.bf16.msra.mxu0 0
    %1331 = vmatprep.mubr.bf16.mxu0 0
    %1332 = vmatmul.mubr.bf16.gmra.mrb[0].mxu0 %v1297
    %v1333 = vpop.f32.mrb[0].mxu0
    %v1334 = vadd.f32 0.0, %v1333
    %v1335 = vpop.f32.mrb[0].mxu0
    %v1336 = vpop.f32.mrb[0].mxu0
    %v1337 = vpop.f32.mrb[0].mxu0
    %1338 = vdwg.mxu0
    %v1340 = vsel %vm977, %v1209, 0
    %1342 = vmatprep.subr.bf16.mxu0 0
    %1343 = vmatpush1.bf16.msra.mxu0 %v971
    %1344 = vmatprep.subr.bf16.mxu0 0
    %1345 = vmatpush1.bf16.msra.mxu0 0
    %1346 = vmatprep.subr.bf16.mxu0 0
    %1347 = vmatpush1.bf16.msra.mxu0 0
    %1348 = vmatprep.subr.bf16.mxu0 0
    %1349 = vmatpush1.bf16.msra.mxu0 0
    %1350 = vmatprep.subr.bf16.mxu0 0
    %1351 = vmatpush1.bf16.msra.mxu0 0
    %1352 = vmatprep.subr.bf16.mxu0 0
    %1353 = vmatpush1.bf16.msra.mxu0 0
    %1354 = vmatprep.subr.bf16.mxu0 0
    %1355 = vmatpush1.bf16.msra.mxu0 0
    %1356 = vmatprep.subr.bf16.mxu0 0
    %1357 = vmatpush1.bf16.msra.mxu0 0
    %1358 = vmatprep.subr.bf16.mxu0 0
    %1359 = vmatpush1.bf16.msra.mxu0 0
    %1360 = vmatprep.subr.bf16.mxu0 0
    %1361 = vmatpush1.bf16.msra.mxu0 0
    %1362 = vmatprep.subr.bf16.mxu0 0
    %1363 = vmatpush1.bf16.msra.mxu0 0
    %1364 = vmatprep.subr.bf16.mxu0 0
    %1365 = vmatpush1.bf16.msra.mxu0 0
    %1366 = vmatprep.subr.bf16.mxu0 0
    %1367 = vmatpush1.bf16.msra.mxu0 0
    %1368 = vmatprep.subr.bf16.mxu0 0
    %1369 = vmatpush1.bf16.msra.mxu0 0
    %1370 = vmatprep.subr.bf16.mxu0 0
    %1371 = vmatpush1.bf16.msra.mxu0 0
    %1372 = vmatprep.subr.bf16.mxu0 0
    %1373 = vmatpush1.bf16.msra.mxu0 0
    %1374 = vmatprep.mubr.bf16.mxu0 0
    %1375 = vmatmul.mubr.bf16.gmra.mrb[0].mxu0 %v1340
    %v1376 = vpop.f32.mrb[0].mxu0
    %v1377 = vadd.f32 0.0, %v1376
    %v1378 = vpop.f32.mrb[0].mxu0
    %v1379 = vpop.f32.mrb[0].mxu0
    %v1380 = vpop.f32.mrb[0].mxu0
    %1381 = vdwg.mxu0
    %v1382 = vpack.c.bf16 %v1248, %v1248
    %v1383 = vpack.c.bf16 %v1291, %v1291
    %v1384 = vpack.c.bf16 %v1334, %v1334
    %v1385 = vpack.c.bf16 %v1377, %v1377
    %v1388 = vunpack.c.l.b16 %v236
    %v1389 = vunpack.c.l.b16 %v237
    %v1390 = vpack.c.b16 %v1389, %v1388
    %v1393 = vsel %vm977, %v1382, 0
    %1395 = vmatprep.subr.bf16.mxu0 0
    %1396 = vmatpush1.bf16.msra.mxu0 %v1390
    %1397 = vmatprep.subr.bf16.mxu0 0
    %1398 = vmatpush1.bf16.msra.mxu0 0
    %1399 = vmatprep.subr.bf16.mxu0 0
    %1400 = vmatpush1.bf16.msra.mxu0 0
    %1401 = vmatprep.subr.bf16.mxu0 0
    %1402 = vmatpush1.bf16.msra.mxu0 0
    %1403 = vmatprep.subr.bf16.mxu0 0
    %1404 = vmatpush1.bf16.msra.mxu0 0
    %1405 = vmatprep.subr.bf16.mxu0 0
    %1406 = vmatpush1.bf16.msra.mxu0 0
    %1407 = vmatprep.subr.bf16.mxu0 0
    %1408 = vmatpush1.bf16.msra.mxu0 0
    %1409 = vmatprep.subr.bf16.mxu0 0
    %1410 = vmatpush1.bf16.msra.mxu0 0
    %1411 = vmatprep.subr.bf16.mxu0 0
    %1412 = vmatpush1.bf16.msra.mxu0 0
    %1413 = vmatprep.subr.bf16.mxu0 0
    %1414 = vmatpush1.bf16.msra.mxu0 0
    %1415 = vmatprep.subr.bf16.mxu0 0
    %1416 = vmatpush1.bf16.msra.mxu0 0
    %1417 = vmatprep.subr.bf16.mxu0 0
    %1418 = vmatpush1.bf16.msra.mxu0 0
    %1419 = vmatprep.subr.bf16.mxu0 0
    %1420 = vmatpush1.bf16.msra.mxu0 0
    %1421 = vmatprep.subr.bf16.mxu0 0
    %1422 = vmatpush1.bf16.msra.mxu0 0
    %1423 = vmatprep.subr.bf16.mxu0 0
    %1424 = vmatpush1.bf16.msra.mxu0 0
    %1425 = vmatprep.subr.bf16.mxu0 0
    %1426 = vmatpush1.bf16.msra.mxu0 0
    %1427 = vmatprep.mubr.bf16.mxu0 0
    %1428 = vmatmul.mubr.bf16.gmra.mrb[0].mxu0 %v1393
    %v1429 = vpop.f32.mrb[0].mxu0
    %v1430 = vadd.f32 0.0, %v1429
    %v1431 = vpop.f32.mrb[0].mxu0
    %v1432 = vpop.f32.mrb[0].mxu0
    %v1433 = vpop.f32.mrb[0].mxu0
    %1434 = vdwg.mxu0
    %v1437 = vunpack.c.l.b16 %v238
    %v1438 = vunpack.c.l.b16 %v239
    %v1439 = vpack.c.b16 %v1438, %v1437
    %v1442 = vsel %vm977, %v1383, 0
    %1444 = vmatprep.subr.bf16.mxu0 0
    %1445 = vmatpush1.bf16.msra.mxu0 %v1439
    %1446 = vmatprep.subr.bf16.mxu0 0
    %1447 = vmatpush1.bf16.msra.mxu0 0
    %1448 = vmatprep.subr.bf16.mxu0 0
    %1449 = vmatpush1.bf16.msra.mxu0 0
    %1450 = vmatprep.subr.bf16.mxu0 0
    %1451 = vmatpush1.bf16.msra.mxu0 0
    %1452 = vmatprep.subr.bf16.mxu0 0
    %1453 = vmatpush1.bf16.msra.mxu0 0
    %1454 = vmatprep.subr.bf16.mxu0 0
    %1455 = vmatpush1.bf16.msra.mxu0 0
    %1456 = vmatprep.subr.bf16.mxu0 0
    %1457 = vmatpush1.bf16.msra.mxu0 0
    %1458 = vmatprep.subr.bf16.mxu0 0
    %1459 = vmatpush1.bf16.msra.mxu0 0
    %1460 = vmatprep.subr.bf16.mxu0 0
    %1461 = vmatpush1.bf16.msra.mxu0 0
    %1462 = vmatprep.subr.bf16.mxu0 0
    %1463 = vmatpush1.bf16.msra.mxu0 0
    %1464 = vmatprep.subr.bf16.mxu0 0
    %1465 = vmatpush1.bf16.msra.mxu0 0
    %1466 = vmatprep.subr.bf16.mxu0 0
    %1467 = vmatpush1.bf16.msra.mxu0 0
    %1468 = vmatprep.subr.bf16.mxu0 0
    %1469 = vmatpush1.bf16.msra.mxu0 0
    %1470 = vmatprep.subr.bf16.mxu0 0
    %1471 = vmatpush1.bf16.msra.mxu0 0
    %1472 = vmatprep.subr.bf16.mxu0 0
    %1473 = vmatpush1.bf16.msra.mxu0 0
    %1474 = vmatprep.subr.bf16.mxu0 0
    %1475 = vmatpush1.bf16.msra.mxu0 0
    %1476 = vmatprep.mubr.bf16.mxu0 0
    %1477 = vmatmul.mubr.bf16.gmra.mrb[0].mxu0 %v1442
    %v1478 = vpop.f32.mrb[0].mxu0
    %v1479 = vadd.f32 0.0, %v1478
    %v1480 = vpop.f32.mrb[0].mxu0
    %v1481 = vpop.f32.mrb[0].mxu0
    %v1482 = vpop.f32.mrb[0].mxu0
    %1483 = vdwg.mxu0
    %v1486 = vunpack.c.l.b16 %v240
    %v1487 = vunpack.c.l.b16 %v241
    %v1488 = vpack.c.b16 %v1487, %v1486
    %v1491 = vsel %vm977, %v1384, 0
    %1493 = vmatprep.subr.bf16.mxu0 0
    %1494 = vmatpush1.bf16.msra.mxu0 %v1488
    %1495 = vmatprep.subr.bf16.mxu0 0
    %1496 = vmatpush1.bf16.msra.mxu0 0
    %1497 = vmatprep.subr.bf16.mxu0 0
    %1498 = vmatpush1.bf16.msra.mxu0 0
    %1499 = vmatprep.subr.bf16.mxu0 0
    %1500 = vmatpush1.bf16.msra.mxu0 0
    %1501 = vmatprep.subr.bf16.mxu0 0
    %1502 = vmatpush1.bf16.msra.mxu0 0
    %1503 = vmatprep.subr.bf16.mxu0 0
    %1504 = vmatpush1.bf16.msra.mxu0 0
    %1505 = vmatprep.subr.bf16.mxu0 0
    %1506 = vmatpush1.bf16.msra.mxu0 0
    %1507 = vmatprep.subr.bf16.mxu0 0
    %1508 = vmatpush1.bf16.msra.mxu0 0
    %1509 = vmatprep.subr.bf16.mxu0 0
    %1510 = vmatpush1.bf16.msra.mxu0 0
    %1511 = vmatprep.subr.bf16.mxu0 0
    %1512 = vmatpush1.bf16.msra.mxu0 0
    %1513 = vmatprep.subr.bf16.mxu0 0
    %1514 = vmatpush1.bf16.msra.mxu0 0
    %1515 = vmatprep.subr.bf16.mxu0 0
    %1516 = vmatpush1.bf16.msra.mxu0 0
    %1517 = vmatprep.subr.bf16.mxu0 0
    %1518 = vmatpush1.bf16.msra.mxu0 0
    %1519 = vmatprep.subr.bf16.mxu0 0
    %1520 = vmatpush1.bf16.msra.mxu0 0
    %1521 = vmatprep.subr.bf16.mxu0 0
    %1522 = vmatpush1.bf16.msra.mxu0 0
    %1523 = vmatprep.subr.bf16.mxu0 0
    %1524 = vmatpush1.bf16.msra.mxu0 0
    %1525 = vmatprep.mubr.bf16.mxu0 0
    %1526 = vmatmul.mubr.bf16.gmra.mrb[0].mxu0 %v1491
    %v1527 = vpop.f32.mrb[0].mxu0
    %v1528 = vadd.f32 0.0, %v1527
    %v1529 = vpop.f32.mrb[0].mxu0
    %v1530 = vpop.f32.mrb[0].mxu0
    %v1531 = vpop.f32.mrb[0].mxu0
    %1532 = vdwg.mxu0
    %v1535 = vunpack.c.l.b16 %v242
    %v1536 = vunpack.c.l.b16 %v243
    %v1537 = vpack.c.b16 %v1536, %v1535
    %v1540 = vsel %vm977, %v1385, 0
    %1542 = vmatprep.subr.bf16.mxu0 0
    %1543 = vmatpush1.bf16.msra.mxu0 %v1537
    %1544 = vmatprep.subr.bf16.mxu0 0
    %1545 = vmatpush1.bf16.msra.mxu0 0
    %1546 = vmatprep.subr.bf16.mxu0 0
    %1547 = vmatpush1.bf16.msra.mxu0 0
    %1548 = vmatprep.subr.bf16.mxu0 0
    %1549 = vmatpush1.bf16.msra.mxu0 0
    %1550 = vmatprep.subr.bf16.mxu0 0
    %1551 = vmatpush1.bf16.msra.mxu0 0
    %1552 = vmatprep.subr.bf16.mxu0 0
    %1553 = vmatpush1.bf16.msra.mxu0 0
    %1554 = vmatprep.subr.bf16.mxu0 0
    %1555 = vmatpush1.bf16.msra.mxu0 0
    %1556 = vmatprep.subr.bf16.mxu0 0
    %1557 = vmatpush1.bf16.msra.mxu0 0
    %1558 = vmatprep.subr.bf16.mxu0 0
    %1559 = vmatpush1.bf16.msra.mxu0 0
    %1560 = vmatprep.subr.bf16.mxu0 0
    %1561 = vmatpush1.bf16.msra.mxu0 0
    %1562 = vmatprep.subr.bf16.mxu0 0
    %1563 = vmatpush1.bf16.msra.mxu0 0
    %1564 = vmatprep.subr.bf16.mxu0 0
    %1565 = vmatpush1.bf16.msra.mxu0 0
    %1566 = vmatprep.subr.bf16.mxu0 0
    %1567 = vmatpush1.bf16.msra.mxu0 0
    %1568 = vmatprep.subr.bf16.mxu0 0
    %1569 = vmatpush1.bf16.msra.mxu0 0
    %1570 = vmatprep.subr.bf16.mxu0 0
    %1571 = vmatpush1.bf16.msra.mxu0 0
    %1572 = vmatprep.subr.bf16.mxu0 0
    %1573 = vmatpush1.bf16.msra.mxu0 0
    %1574 = vmatprep.mubr.bf16.mxu0 0
    %1575 = vmatmul.mubr.bf16.gmra.mrb[0].mxu0 %v1540
    %v1576 = vpop.f32.mrb[0].mxu0
    %v1577 = vadd.f32 0.0, %v1576
    %v1578 = vpop.f32.mrb[0].mxu0
    %v1579 = vpop.f32.mrb[0].mxu0
    %v1580 = vpop.f32.mrb[0].mxu0
    %1581 = vdwg.mxu0
    %v1582 = vadd.f32 %v1430, %v1479
    %v1583 = vadd.f32 %v1582, %v1528
    %v1584 = vadd.f32 %v1583, %v1577
    %v1585 = vlaneseq
    %v1586 = vshrl.u32 %v1585, 7
    %v1587 = vsub.s32 1, %v1586
    %v1588 = vrot.slane %v64, %v1587
    %v1590 = vrot.slane %v459, 4
    %v1592 = vsel %vm977, %v1590, 0
    %v1595 = vsel %vm977, %v958, 0
    %1597 = vmatprep.subr.bf16.mxu0 0
    %1598 = vmatpush1.bf16.xpose.msra.mxu0 %v1595
    %1599 = vmatprep.subr.bf16.mxu0 0
    %1600 = vmatpush1.bf16.xpose.msra.mxu0 0
    %1601 = vmatprep.subr.bf16.mxu0 0
    %1602 = vmatpush1.bf16.xpose.msra.mxu0 0
    %1603 = vmatprep.subr.bf16.mxu0 0
    %1604 = vmatpush1.bf16.xpose.msra.mxu0 0
    %1605 = vmatprep.subr.bf16.mxu0 0
    %1606 = vmatpush1.bf16.xpose.msra.mxu0 0
    %1607 = vmatprep.subr.bf16.mxu0 0
    %1608 = vmatpush1.bf16.xpose.msra.mxu0 0
    %1609 = vmatprep.subr.bf16.mxu0 0
    %1610 = vmatpush1.bf16.xpose.msra.mxu0 0
    %1611 = vmatprep.subr.bf16.mxu0 0
    %1612 = vmatpush1.bf16.xpose.msra.mxu0 0
    %1613 = vmatprep.subr.bf16.mxu0 0
    %1614 = vmatpush1.bf16.xpose.msra.mxu0 0
    %1615 = vmatprep.subr.bf16.mxu0 0
    %1616 = vmatpush1.bf16.xpose.msra.mxu0 0
    %1617 = vmatprep.subr.bf16.mxu0 0
    %1618 = vmatpush1.bf16.xpose.msra.mxu0 0
    %1619 = vmatprep.subr.bf16.mxu0 0
    %1620 = vmatpush1.bf16.xpose.msra.mxu0 0
    %1621 = vmatprep.subr.bf16.mxu0 0
    %1622 = vmatpush1.bf16.xpose.msra.mxu0 0
    %1623 = vmatprep.subr.bf16.mxu0 0
    %1624 = vmatpush1.bf16.xpose.msra.mxu0 0
    %1625 = vmatprep.subr.bf16.mxu0 0
    %1626 = vmatpush1.bf16.xpose.msra.mxu0 0
    %1627 = vmatprep.subr.bf16.mxu0 0
    %1628 = vmatpush1.bf16.xpose.msra.mxu0 0
    %1629 = vmatprep.mubr.bf16.mxu0 0
    %1630 = vmatmul.mubr.bf16.gmra.mrb[0].mxu0 %v1592
    %v1631 = vpop.f32.mrb[0].mxu0
    %v1632 = vadd.f32 %v1588, %v1631
    %v1633 = vpop.f32.mrb[0].mxu0
    %v1634 = vpop.f32.mrb[0].mxu0
    %v1635 = vpop.f32.mrb[0].mxu0
    %1636 = vdwg.mxu0
    %v1638 = vrot.slane %v460, 4
    %v1640 = vsel %vm977, %v1638, 0
    %v1643 = vsel %vm977, %v960, 0
    %1645 = vmatprep.subr.bf16.mxu0 0
    %1646 = vmatpush1.bf16.xpose.msra.mxu0 %v1643
    %1647 = vmatprep.subr.bf16.mxu0 0
    %1648 = vmatpush1.bf16.xpose.msra.mxu0 0
    %1649 = vmatprep.subr.bf16.mxu0 0
    %1650 = vmatpush1.bf16.xpose.msra.mxu0 0
    %1651 = vmatprep.subr.bf16.mxu0 0
    %1652 = vmatpush1.bf16.xpose.msra.mxu0 0
    %1653 = vmatprep.subr.bf16.mxu0 0
    %1654 = vmatpush1.bf16.xpose.msra.mxu0 0
    %1655 = vmatprep.subr.bf16.mxu0 0
    %1656 = vmatpush1.bf16.xpose.msra.mxu0 0
    %1657 = vmatprep.subr.bf16.mxu0 0
    %1658 = vmatpush1.bf16.xpose.msra.mxu0 0
    %1659 = vmatprep.subr.bf16.mxu0 0
    %1660 = vmatpush1.bf16.xpose.msra.mxu0 0
    %1661 = vmatprep.subr.bf16.mxu0 0
    %1662 = vmatpush1.bf16.xpose.msra.mxu0 0
    %1663 = vmatprep.subr.bf16.mxu0 0
    %1664 = vmatpush1.bf16.xpose.msra.mxu0 0
    %1665 = vmatprep.subr.bf16.mxu0 0
    %1666 = vmatpush1.bf16.xpose.msra.mxu0 0
    %1667 = vmatprep.subr.bf16.mxu0 0
    %1668 = vmatpush1.bf16.xpose.msra.mxu0 0
    %1669 = vmatprep.subr.bf16.mxu0 0
    %1670 = vmatpush1.bf16.xpose.msra.mxu0 0
    %1671 = vmatprep.subr.bf16.mxu0 0
    %1672 = vmatpush1.bf16.xpose.msra.mxu0 0
    %1673 = vmatprep.subr.bf16.mxu0 0
    %1674 = vmatpush1.bf16.xpose.msra.mxu0 0
    %1675 = vmatprep.subr.bf16.mxu0 0
    %1676 = vmatpush1.bf16.xpose.msra.mxu0 0
    %1677 = vmatprep.mubr.bf16.mxu0 0
    %1678 = vmatmul.mubr.bf16.gmra.mrb[0].mxu0 %v1640
    %v1679 = vpop.f32.mrb[0].mxu0
    %v1680 = vadd.f32 %v1588, %v1679
    %v1681 = vpop.f32.mrb[0].mxu0
    %v1682 = vpop.f32.mrb[0].mxu0
    %v1683 = vpop.f32.mrb[0].mxu0
    %1684 = vdwg.mxu0
    %v1686 = vrot.slane %v461, 4
    %v1688 = vsel %vm977, %v1686, 0
    %v1691 = vsel %vm977, %v962, 0
    %1693 = vmatprep.subr.bf16.mxu0 0
    %1694 = vmatpush1.bf16.xpose.msra.mxu0 %v1691
    %1695 = vmatprep.subr.bf16.mxu0 0
    %1696 = vmatpush1.bf16.xpose.msra.mxu0 0
    %1697 = vmatprep.subr.bf16.mxu0 0
    %1698 = vmatpush1.bf16.xpose.msra.mxu0 0
    %1699 = vmatprep.subr.bf16.mxu0 0
    %1700 = vmatpush1.bf16.xpose.msra.mxu0 0
    %1701 = vmatprep.subr.bf16.mxu0 0
    %1702 = vmatpush1.bf16.xpose.msra.mxu0 0
    %1703 = vmatprep.subr.bf16.mxu0 0
    %1704 = vmatpush1.bf16.xpose.msra.mxu0 0
    %1705 = vmatprep.subr.bf16.mxu0 0
    %1706 = vmatpush1.bf16.xpose.msra.mxu0 0
    %1707 = vmatprep.subr.bf16.mxu0 0
    %1708 = vmatpush1.bf16.xpose.msra.mxu0 0
    %1709 = vmatprep.subr.bf16.mxu0 0
    %1710 = vmatpush1.bf16.xpose.msra.mxu0 0
    %1711 = vmatprep.subr.bf16.mxu0 0
    %1712 = vmatpush1.bf16.xpose.msra.mxu0 0
    %1713 = vmatprep.subr.bf16.mxu0 0
    %1714 = vmatpush1.bf16.xpose.msra.mxu0 0
    %1715 = vmatprep.subr.bf16.mxu0 0
    %1716 = vmatpush1.bf16.xpose.msra.mxu0 0
    %1717 = vmatprep.subr.bf16.mxu0 0
    %1718 = vmatpush1.bf16.xpose.msra.mxu0 0
    %1719 = vmatprep.subr.bf16.mxu0 0
    %1720 = vmatpush1.bf16.xpose.msra.mxu0 0
    %1721 = vmatprep.subr.bf16.mxu0 0
    %1722 = vmatpush1.bf16.xpose.msra.mxu0 0
    %1723 = vmatprep.subr.bf16.mxu0 0
    %1724 = vmatpush1.bf16.xpose.msra.mxu0 0
    %1725 = vmatprep.mubr.bf16.mxu0 0
    %1726 = vmatmul.mubr.bf16.gmra.mrb[0].mxu0 %v1688
    %v1727 = vpop.f32.mrb[0].mxu0
    %v1728 = vadd.f32 %v1588, %v1727
    %v1729 = vpop.f32.mrb[0].mxu0
    %v1730 = vpop.f32.mrb[0].mxu0
    %v1731 = vpop.f32.mrb[0].mxu0
    %1732 = vdwg.mxu0
    %v1734 = vrot.slane %v462, 4
    %v1736 = vsel %vm977, %v1734, 0
    %v1739 = vsel %vm977, %v964, 0
    %1741 = vmatprep.subr.bf16.mxu0 0
    %1742 = vmatpush1.bf16.xpose.msra.mxu0 %v1739
    %1743 = vmatprep.subr.bf16.mxu0 0
    %1744 = vmatpush1.bf16.xpose.msra.mxu0 0
    %1745 = vmatprep.subr.bf16.mxu0 0
    %1746 = vmatpush1.bf16.xpose.msra.mxu0 0
    %1747 = vmatprep.subr.bf16.mxu0 0
    %1748 = vmatpush1.bf16.xpose.msra.mxu0 0
    %1749 = vmatprep.subr.bf16.mxu0 0
    %1750 = vmatpush1.bf16.xpose.msra.mxu0 0
    %1751 = vmatprep.subr.bf16.mxu0 0
    %1752 = vmatpush1.bf16.xpose.msra.mxu0 0
    %1753 = vmatprep.subr.bf16.mxu0 0
    %1754 = vmatpush1.bf16.xpose.msra.mxu0 0
    %1755 = vmatprep.subr.bf16.mxu0 0
    %1756 = vmatpush1.bf16.xpose.msra.mxu0 0
    %1757 = vmatprep.subr.bf16.mxu0 0
    %1758 = vmatpush1.bf16.xpose.msra.mxu0 0
    %1759 = vmatprep.subr.bf16.mxu0 0
    %1760 = vmatpush1.bf16.xpose.msra.mxu0 0
    %1761 = vmatprep.subr.bf16.mxu0 0
    %1762 = vmatpush1.bf16.xpose.msra.mxu0 0
    %1763 = vmatprep.subr.bf16.mxu0 0
    %1764 = vmatpush1.bf16.xpose.msra.mxu0 0
    %1765 = vmatprep.subr.bf16.mxu0 0
    %1766 = vmatpush1.bf16.xpose.msra.mxu0 0
    %1767 = vmatprep.subr.bf16.mxu0 0
    %1768 = vmatpush1.bf16.xpose.msra.mxu0 0
    %1769 = vmatprep.subr.bf16.mxu0 0
    %1770 = vmatpush1.bf16.xpose.msra.mxu0 0
    %1771 = vmatprep.subr.bf16.mxu0 0
    %1772 = vmatpush1.bf16.xpose.msra.mxu0 0
    %1773 = vmatprep.mubr.bf16.mxu0 0
    %1774 = vmatmul.mubr.bf16.gmra.mrb[0].mxu0 %v1736
    %v1775 = vpop.f32.mrb[0].mxu0
    %v1776 = vadd.f32 %v1588, %v1775
    %v1777 = vpop.f32.mrb[0].mxu0
    %v1778 = vpop.f32.mrb[0].mxu0
    %v1779 = vpop.f32.mrb[0].mxu0
    %1780 = vdwg.mxu0
    %v1781 = vsel %vm977, %v1632, -inf
    %1782 = vmax.xlane.f32.xlu0 %v1781
    %v1783 = vpop.xlane.xlu0 %1782
    %v1784 = vsel %vm977, %v1680, -inf
    %1785 = vmax.xlane.f32.xlu0 %v1784
    %v1786 = vpop.xlane.xlu0 %1785
    %v1787 = vsel %vm977, %v1728, -inf
    %1788 = vmax.xlane.f32.xlu0 %v1787
    %v1789 = vpop.xlane.xlu0 %1788
    %v1790 = vsel %vm977, %v1776, -inf
    %1791 = vmax.xlane.f32.xlu0 %v1790
    %v1792 = vpop.xlane.xlu0 %1791
    %v1793 = vsub.f32 %v1632, %v1783
    %v1794 = vsub.f32 %v1680, %v1786
    %v1795 = vsub.f32 %v1728, %v1789
    %v1796 = vsub.f32 %v1776, %v1792
    %v1797 = vmul.f32 %v1793, 1.442695
    %v1798 = vpow.pop %v1797
    %v1799 = vmul.f32 %v1794, 1.442695
    %v1800 = vpow.pop %v1799
    %v1801 = vmul.f32 %v1795, 1.442695
    %v1802 = vpow.pop %v1801
    %v1803 = vmul.f32 %v1796, 1.442695
    %v1804 = vpow.pop %v1803
    %v1805 = vsel %vm977, %v1798, 0.0
    %1806 = vadd.xlane.f32.xlu0 %v1805
    %v1807 = vpop.xlane.xlu0 %1806
    %v1808 = vsel %vm977, %v1800, 0.0
    %1809 = vadd.xlane.f32.xlu0 %v1808
    %v1810 = vpop.xlane.xlu0 %1809
    %v1811 = vsel %vm977, %v1802, 0.0
    %1812 = vadd.xlane.f32.xlu0 %v1811
    %v1813 = vpop.xlane.xlu0 %1812
    %v1814 = vsel %vm977, %v1804, 0.0
    %1815 = vadd.xlane.f32.xlu0 %v1814
    %v1816 = vpop.xlane.xlu0 %1815
    %v1817 = vrcp.pop %v1807
    %v1818 = vrcp.pop %v1810
    %v1819 = vrcp.pop %v1813
    %v1820 = vrcp.pop %v1816
    %v1821 = vmul.f32 %v1798, %v1817
    %v1822 = vmul.f32 %v1800, %v1818
    %v1823 = vmul.f32 %v1802, %v1819
    %v1824 = vmul.f32 %v1804, %v1820
    %v1825 = vpack.c.bf16 %v1821, %v1821
    %v1826 = vpack.c.bf16 %v1822, %v1822
    %v1827 = vpack.c.bf16 %v1823, %v1823
    %v1828 = vpack.c.bf16 %v1824, %v1824
    %v1830 = vsel %vm977, %v1825, 0
    %1832 = vmatprep.subr.bf16.mxu0 0
    %1833 = vmatpush1.bf16.msra.mxu0 %v966
    %1834 = vmatprep.subr.bf16.mxu0 0
    %1835 = vmatpush1.bf16.msra.mxu0 0
    %1836 = vmatprep.subr.bf16.mxu0 0
    %1837 = vmatpush1.bf16.msra.mxu0 0
    %1838 = vmatprep.subr.bf16.mxu0 0
    %1839 = vmatpush1.bf16.msra.mxu0 0
    %1840 = vmatprep.subr.bf16.mxu0 0
    %1841 = vmatpush1.bf16.msra.mxu0 0
    %1842 = vmatprep.subr.bf16.mxu0 0
    %1843 = vmatpush1.bf16.msra.mxu0 0
    %1844 = vmatprep.subr.bf16.mxu0 0
    %1845 = vmatpush1.bf16.msra.mxu0 0
    %1846 = vmatprep.subr.bf16.mxu0 0
    %1847 = vmatpush1.bf16.msra.mxu0 0
    %1848 = vmatprep.subr.bf16.mxu0 0
    %1849 = vmatpush1.bf16.msra.mxu0 0
    %1850 = vmatprep.subr.bf16.mxu0 0
    %1851 = vmatpush1.bf16.msra.mxu0 0
    %1852 = vmatprep.subr.bf16.mxu0 0
    %1853 = vmatpush1.bf16.msra.mxu0 0
    %1854 = vmatprep.subr.bf16.mxu0 0
    %1855 = vmatpush1.bf16.msra.mxu0 0
    %1856 = vmatprep.subr.bf16.mxu0 0
    %1857 = vmatpush1.bf16.msra.mxu0 0
    %1858 = vmatprep.subr.bf16.mxu0 0
    %1859 = vmatpush1.bf16.msra.mxu0 0
    %1860 = vmatprep.subr.bf16.mxu0 0
    %1861 = vmatpush1.bf16.msra.mxu0 0
    %1862 = vmatprep.subr.bf16.mxu0 0
    %1863 = vmatpush1.bf16.msra.mxu0 0
    %1864 = vmatprep.mubr.bf16.mxu0 0
    %1865 = vmatmul.mubr.bf16.gmra.mrb[0].mxu0 %v1830
    %v1866 = vpop.f32.mrb[0].mxu0
    %v1867 = vadd.f32 0.0, %v1866
    %v1868 = vpop.f32.mrb[0].mxu0
    %v1869 = vpop.f32.mrb[0].mxu0
    %v1870 = vpop.f32.mrb[0].mxu0
    %1871 = vdwg.mxu0
    %v1873 = vsel %vm977, %v1826, 0
    %1875 = vmatprep.subr.bf16.mxu0 0
    %1876 = vmatpush1.bf16.msra.mxu0 %v968
    %1877 = vmatprep.subr.bf16.mxu0 0
    %1878 = vmatpush1.bf16.msra.mxu0 0
    %1879 = vmatprep.subr.bf16.mxu0 0
    %1880 = vmatpush1.bf16.msra.mxu0 0
    %1881 = vmatprep.subr.bf16.mxu0 0
    %1882 = vmatpush1.bf16.msra.mxu0 0
    %1883 = vmatprep.subr.bf16.mxu0 0
    %1884 = vmatpush1.bf16.msra.mxu0 0
    %1885 = vmatprep.subr.bf16.mxu0 0
    %1886 = vmatpush1.bf16.msra.mxu0 0
    %1887 = vmatprep.subr.bf16.mxu0 0
    %1888 = vmatpush1.bf16.msra.mxu0 0
    %1889 = vmatprep.subr.bf16.mxu0 0
    %1890 = vmatpush1.bf16.msra.mxu0 0
    %1891 = vmatprep.subr.bf16.mxu0 0
    %1892 = vmatpush1.bf16.msra.mxu0 0
    %1893 = vmatprep.subr.bf16.mxu0 0
    %1894 = vmatpush1.bf16.msra.mxu0 0
    %1895 = vmatprep.subr.bf16.mxu0 0
    %1896 = vmatpush1.bf16.msra.mxu0 0
    %1897 = vmatprep.subr.bf16.mxu0 0
    %1898 = vmatpush1.bf16.msra.mxu0 0
    %1899 = vmatprep.subr.bf16.mxu0 0
    %1900 = vmatpush1.bf16.msra.mxu0 0
    %1901 = vmatprep.subr.bf16.mxu0 0
    %1902 = vmatpush1.bf16.msra.mxu0 0
    %1903 = vmatprep.subr.bf16.mxu0 0
    %1904 = vmatpush1.bf16.msra.mxu0 0
    %1905 = vmatprep.subr.bf16.mxu0 0
    %1906 = vmatpush1.bf16.msra.mxu0 0
    %1907 = vmatprep.mubr.bf16.mxu0 0
    %1908 = vmatmul.mubr.bf16.gmra.mrb[0].mxu0 %v1873
    %v1909 = vpop.f32.mrb[0].mxu0
    %v1910 = vadd.f32 0.0, %v1909
    %v1911 = vpop.f32.mrb[0].mxu0
    %v1912 = vpop.f32.mrb[0].mxu0
    %v1913 = vpop.f32.mrb[0].mxu0
    %1914 = vdwg.mxu0
    %v1916 = vsel %vm977, %v1827, 0
    %1918 = vmatprep.subr.bf16.mxu0 0
    %1919 = vmatpush1.bf16.msra.mxu0 %v970
    %1920 = vmatprep.subr.bf16.mxu0 0
    %1921 = vmatpush1.bf16.msra.mxu0 0
    %1922 = vmatprep.subr.bf16.mxu0 0
    %1923 = vmatpush1.bf16.msra.mxu0 0
    %1924 = vmatprep.subr.bf16.mxu0 0
    %1925 = vmatpush1.bf16.msra.mxu0 0
    %1926 = vmatprep.subr.bf16.mxu0 0
    %1927 = vmatpush1.bf16.msra.mxu0 0
    %1928 = vmatprep.subr.bf16.mxu0 0
    %1929 = vmatpush1.bf16.msra.mxu0 0
    %1930 = vmatprep.subr.bf16.mxu0 0
    %1931 = vmatpush1.bf16.msra.mxu0 0
    %1932 = vmatprep.subr.bf16.mxu0 0
    %1933 = vmatpush1.bf16.msra.mxu0 0
    %1934 = vmatprep.subr.bf16.mxu0 0
    %1935 = vmatpush1.bf16.msra.mxu0 0
    %1936 = vmatprep.subr.bf16.mxu0 0
    %1937 = vmatpush1.bf16.msra.mxu0 0
    %1938 = vmatprep.subr.bf16.mxu0 0
    %1939 = vmatpush1.bf16.msra.mxu0 0
    %1940 = vmatprep.subr.bf16.mxu0 0
    %1941 = vmatpush1.bf16.msra.mxu0 0
    %1942 = vmatprep.subr.bf16.mxu0 0
    %1943 = vmatpush1.bf16.msra.mxu0 0
    %1944 = vmatprep.subr.bf16.mxu0 0
    %1945 = vmatpush1.bf16.msra.mxu0 0
    %1946 = vmatprep.subr.bf16.mxu0 0
    %1947 = vmatpush1.bf16.msra.mxu0 0
    %1948 = vmatprep.subr.bf16.mxu0 0
    %1949 = vmatpush1.bf16.msra.mxu0 0
    %1950 = vmatprep.mubr.bf16.mxu0 0
    %1951 = vmatmul.mubr.bf16.gmra.mrb[0].mxu0 %v1916
    %v1952 = vpop.f32.mrb[0].mxu0
    %v1953 = vadd.f32 0.0, %v1952
    %v1954 = vpop.f32.mrb[0].mxu0
    %v1955 = vpop.f32.mrb[0].mxu0
    %v1956 = vpop.f32.mrb[0].mxu0
    %1957 = vdwg.mxu0
    %v1959 = vsel %vm977, %v1828, 0
    %1961 = vmatprep.subr.bf16.mxu0 0
    %1962 = vmatpush1.bf16.msra.mxu0 %v972
    %1963 = vmatprep.subr.bf16.mxu0 0
    %1964 = vmatpush1.bf16.msra.mxu0 0
    %1965 = vmatprep.subr.bf16.mxu0 0
    %1966 = vmatpush1.bf16.msra.mxu0 0
    %1967 = vmatprep.subr.bf16.mxu0 0
    %1968 = vmatpush1.bf16.msra.mxu0 0
    %1969 = vmatprep.subr.bf16.mxu0 0
    %1970 = vmatpush1.bf16.msra.mxu0 0
    %1971 = vmatprep.subr.bf16.mxu0 0
    %1972 = vmatpush1.bf16.msra.mxu0 0
    %1973 = vmatprep.subr.bf16.mxu0 0
    %1974 = vmatpush1.bf16.msra.mxu0 0
    %1975 = vmatprep.subr.bf16.mxu0 0
    %1976 = vmatpush1.bf16.msra.mxu0 0
    %1977 = vmatprep.subr.bf16.mxu0 0
    %1978 = vmatpush1.bf16.msra.mxu0 0
    %1979 = vmatprep.subr.bf16.mxu0 0
    %1980 = vmatpush1.bf16.msra.mxu0 0
    %1981 = vmatprep.subr.bf16.mxu0 0
    %1982 = vmatpush1.bf16.msra.mxu0 0
    %1983 = vmatprep.subr.bf16.mxu0 0
    %1984 = vmatpush1.bf16.msra.mxu0 0
    %1985 = vmatprep.subr.bf16.mxu0 0
    %1986 = vmatpush1.bf16.msra.mxu0 0
    %1987 = vmatprep.subr.bf16.mxu0 0
    %1988 = vmatpush1.bf16.msra.mxu0 0
    %1989 = vmatprep.subr.bf16.mxu0 0
    %1990 = vmatpush1.bf16.msra.mxu0 0
    %1991 = vmatprep.subr.bf16.mxu0 0
    %1992 = vmatpush1.bf16.msra.mxu0 0
    %1993 = vmatprep.mubr.bf16.mxu0 0
    %1994 = vmatmul.mubr.bf16.gmra.mrb[0].mxu0 %v1959
    %v1995 = vpop.f32.mrb[0].mxu0
    %v1996 = vadd.f32 0.0, %v1995
    %v1997 = vpop.f32.mrb[0].mxu0
    %v1998 = vpop.f32.mrb[0].mxu0
    %v1999 = vpop.f32.mrb[0].mxu0
    %2000 = vdwg.mxu0
    %v2001 = vpack.c.bf16 %v1867, %v1867
    %v2002 = vpack.c.bf16 %v1910, %v1910
    %v2003 = vpack.c.bf16 %v1953, %v1953
    %v2004 = vpack.c.bf16 %v1996, %v1996
    %v2006 = vsel %vm977, %v2001, 0
    %2008 = vmatprep.subr.bf16.mxu0 0
    %2009 = vmatpush1.bf16.msra.mxu0 %v1390
    %2010 = vmatprep.subr.bf16.mxu0 0
    %2011 = vmatpush1.bf16.msra.mxu0 0
    %2012 = vmatprep.subr.bf16.mxu0 0
    %2013 = vmatpush1.bf16.msra.mxu0 0
    %2014 = vmatprep.subr.bf16.mxu0 0
    %2015 = vmatpush1.bf16.msra.mxu0 0
    %2016 = vmatprep.subr.bf16.mxu0 0
    %2017 = vmatpush1.bf16.msra.mxu0 0
    %2018 = vmatprep.subr.bf16.mxu0 0
    %2019 = vmatpush1.bf16.msra.mxu0 0
    %2020 = vmatprep.subr.bf16.mxu0 0
    %2021 = vmatpush1.bf16.msra.mxu0 0
    %2022 = vmatprep.subr.bf16.mxu0 0
    %2023 = vmatpush1.bf16.msra.mxu0 0
    %2024 = vmatprep.subr.bf16.mxu0 0
    %2025 = vmatpush1.bf16.msra.mxu0 0
    %2026 = vmatprep.subr.bf16.mxu0 0
    %2027 = vmatpush1.bf16.msra.mxu0 0
    %2028 = vmatprep.subr.bf16.mxu0 0
    %2029 = vmatpush1.bf16.msra.mxu0 0
    %2030 = vmatprep.subr.bf16.mxu0 0
    %2031 = vmatpush1.bf16.msra.mxu0 0
    %2032 = vmatprep.subr.bf16.mxu0 0
    %2033 = vmatpush1.bf16.msra.mxu0 0
    %2034 = vmatprep.subr.bf16.mxu0 0
    %2035 = vmatpush1.bf16.msra.mxu0 0
    %2036 = vmatprep.subr.bf16.mxu0 0
    %2037 = vmatpush1.bf16.msra.mxu0 0
    %2038 = vmatprep.subr.bf16.mxu0 0
    %2039 = vmatpush1.bf16.msra.mxu0 0
    %2040 = vmatprep.mubr.bf16.mxu0 0
    %2041 = vmatmul.mubr.bf16.gmra.mrb[0].mxu0 %v2006
    %v2042 = vpop.f32.mrb[0].mxu0
    %v2043 = vadd.f32 0.0, %v2042
    %v2044 = vpop.f32.mrb[0].mxu0
    %v2045 = vpop.f32.mrb[0].mxu0
    %v2046 = vpop.f32.mrb[0].mxu0
    %2047 = vdwg.mxu0
    %v2049 = vsel %vm977, %v2002, 0
    %2051 = vmatprep.subr.bf16.mxu0 0
    %2052 = vmatpush1.bf16.msra.mxu0 %v1439
    %2053 = vmatprep.subr.bf16.mxu0 0
    %2054 = vmatpush1.bf16.msra.mxu0 0
    %2055 = vmatprep.subr.bf16.mxu0 0
    %2056 = vmatpush1.bf16.msra.mxu0 0
    %2057 = vmatprep.subr.bf16.mxu0 0
    %2058 = vmatpush1.bf16.msra.mxu0 0
    %2059 = vmatprep.subr.bf16.mxu0 0
    %2060 = vmatpush1.bf16.msra.mxu0 0
    %2061 = vmatprep.subr.bf16.mxu0 0
    %2062 = vmatpush1.bf16.msra.mxu0 0
    %2063 = vmatprep.subr.bf16.mxu0 0
    %2064 = vmatpush1.bf16.msra.mxu0 0
    %2065 = vmatprep.subr.bf16.mxu0 0
    %2066 = vmatpush1.bf16.msra.mxu0 0
    %2067 = vmatprep.subr.bf16.mxu0 0
    %2068 = vmatpush1.bf16.msra.mxu0 0
    %2069 = vmatprep.subr.bf16.mxu0 0
    %2070 = vmatpush1.bf16.msra.mxu0 0
    %2071 = vmatprep.subr.bf16.mxu0 0
    %2072 = vmatpush1.bf16.msra.mxu0 0
    %2073 = vmatprep.subr.bf16.mxu0 0
    %2074 = vmatpush1.bf16.msra.mxu0 0
    %2075 = vmatprep.subr.bf16.mxu0 0
    %2076 = vmatpush1.bf16.msra.mxu0 0
    %2077 = vmatprep.subr.bf16.mxu0 0
    %2078 = vmatpush1.bf16.msra.mxu0 0
    %2079 = vmatprep.subr.bf16.mxu0 0
    %2080 = vmatpush1.bf16.msra.mxu0 0
    %2081 = vmatprep.subr.bf16.mxu0 0
    %2082 = vmatpush1.bf16.msra.mxu0 0
    %2083 = vmatprep.mubr.bf16.mxu0 0
    %2084 = vmatmul.mubr.bf16.gmra.mrb[0].mxu0 %v2049
    %v2085 = vpop.f32.mrb[0].mxu0
    %v2086 = vadd.f32 0.0, %v2085
    %v2087 = vpop.f32.mrb[0].mxu0
    %v2088 = vpop.f32.mrb[0].mxu0
    %v2089 = vpop.f32.mrb[0].mxu0
    %2090 = vdwg.mxu0
    %v2092 = vsel %vm977, %v2003, 0
    %2094 = vmatprep.subr.bf16.mxu0 0
    %2095 = vmatpush1.bf16.msra.mxu0 %v1488
    %2096 = vmatprep.subr.bf16.mxu0 0
    %2097 = vmatpush1.bf16.msra.mxu0 0
    %2098 = vmatprep.subr.bf16.mxu0 0
    %2099 = vmatpush1.bf16.msra.mxu0 0
    %2100 = vmatprep.subr.bf16.mxu0 0
    %2101 = vmatpush1.bf16.msra.mxu0 0
    %2102 = vmatprep.subr.bf16.mxu0 0
    %2103 = vmatpush1.bf16.msra.mxu0 0
    %2104 = vmatprep.subr.bf16.mxu0 0
    %2105 = vmatpush1.bf16.msra.mxu0 0
    %2106 = vmatprep.subr.bf16.mxu0 0
    %2107 = vmatpush1.bf16.msra.mxu0 0
    %2108 = vmatprep.subr.bf16.mxu0 0
    %2109 = vmatpush1.bf16.msra.mxu0 0
    %2110 = vmatprep.subr.bf16.mxu0 0
    %2111 = vmatpush1.bf16.msra.mxu0 0
    %2112 = vmatprep.subr.bf16.mxu0 0
    %2113 = vmatpush1.bf16.msra.mxu0 0
    %2114 = vmatprep.subr.bf16.mxu0 0
    %2115 = vmatpush1.bf16.msra.mxu0 0
    %2116 = vmatprep.subr.bf16.mxu0 0
    %2117 = vmatpush1.bf16.msra.mxu0 0
    %2118 = vmatprep.subr.bf16.mxu0 0
    %2119 = vmatpush1.bf16.msra.mxu0 0
    %2120 = vmatprep.subr.bf16.mxu0 0
    %2121 = vmatpush1.bf16.msra.mxu0 0
    %2122 = vmatprep.subr.bf16.mxu0 0
    %2123 = vmatpush1.bf16.msra.mxu0 0
    %2124 = vmatprep.subr.bf16.mxu0 0
    %2125 = vmatpush1.bf16.msra.mxu0 0
    %2126 = vmatprep.mubr.bf16.mxu0 0
    %2127 = vmatmul.mubr.bf16.gmra.mrb[0].mxu0 %v2092
    %v2128 = vpop.f32.mrb[0].mxu0
    %v2129 = vadd.f32 0.0, %v2128
    %v2130 = vpop.f32.mrb[0].mxu0
    %v2131 = vpop.f32.mrb[0].mxu0
    %v2132 = vpop.f32.mrb[0].mxu0
    %2133 = vdwg.mxu0
    %v2135 = vsel %vm977, %v2004, 0
    %2137 = vmatprep.subr.bf16.mxu0 0
    %2138 = vmatpush1.bf16.msra.mxu0 %v1537
    %2139 = vmatprep.subr.bf16.mxu0 0
    %2140 = vmatpush1.bf16.msra.mxu0 0
    %2141 = vmatprep.subr.bf16.mxu0 0
    %2142 = vmatpush1.bf16.msra.mxu0 0
    %2143 = vmatprep.subr.bf16.mxu0 0
    %2144 = vmatpush1.bf16.msra.mxu0 0
    %2145 = vmatprep.subr.bf16.mxu0 0
    %2146 = vmatpush1.bf16.msra.mxu0 0
    %2147 = vmatprep.subr.bf16.mxu0 0
    %2148 = vmatpush1.bf16.msra.mxu0 0
    %2149 = vmatprep.subr.bf16.mxu0 0
    %2150 = vmatpush1.bf16.msra.mxu0 0
    %2151 = vmatprep.subr.bf16.mxu0 0
    %2152 = vmatpush1.bf16.msra.mxu0 0
    %2153 = vmatprep.subr.bf16.mxu0 0
    %2154 = vmatpush1.bf16.msra.mxu0 0
    %2155 = vmatprep.subr.bf16.mxu0 0
    %2156 = vmatpush1.bf16.msra.mxu0 0
    %2157 = vmatprep.subr.bf16.mxu0 0
    %2158 = vmatpush1.bf16.msra.mxu0 0
    %2159 = vmatprep.subr.bf16.mxu0 0
    %2160 = vmatpush1.bf16.msra.mxu0 0
    %2161 = vmatprep.subr.bf16.mxu0 0
    %2162 = vmatpush1.bf16.msra.mxu0 0
    %2163 = vmatprep.subr.bf16.mxu0 0
    %2164 = vmatpush1.bf16.msra.mxu0 0
    %2165 = vmatprep.subr.bf16.mxu0 0
    %2166 = vmatpush1.bf16.msra.mxu0 0
    %2167 = vmatprep.subr.bf16.mxu0 0
    %2168 = vmatpush1.bf16.msra.mxu0 0
    %2169 = vmatprep.mubr.bf16.mxu0 0
    %2170 = vmatmul.mubr.bf16.gmra.mrb[0].mxu0 %v2135
    %v2171 = vpop.f32.mrb[0].mxu0
    %v2172 = vadd.f32 0.0, %v2171
    %v2173 = vpop.f32.mrb[0].mxu0
    %v2174 = vpop.f32.mrb[0].mxu0
    %v2175 = vpop.f32.mrb[0].mxu0
    %2176 = vdwg.mxu0
    %v2177 = vadd.f32 %v2043, %v2086
    %v2178 = vadd.f32 %v2177, %v2129
    %v2179 = vadd.f32 %v2178, %v2172
    %v2180 = vld [vmem:[%s10] sm:$0x1]
    %v2182 = vlaneseq
    %v2183 = vshrl.u32 %v2182, 7
    %v2184 = vsub.s32 0, %v2183
    %v2185 = vrot.slane %v2180, %v2184
    %v2187 = vadd.f32 %v1584, %v2185
    %v2188 = vadd.f32 %v2179, %v2185
    %v2189 = vadd.f32 %v2187, %v58
    %v2190 = vadd.f32 %v2188, %v59
    %v2191 = vld [vmem:[%s11] sm:$0x1]
    %v2192 = vld [vmem:[%s12] sm:$0x1]
    %v2193 = vsel %vm67, %v2189, 0.0
    %2194 = vadd.xlane.f32.xlu0 %v2193
    %v2195 = vpop.xlane.xlu0 %2194
    %v2196 = vsel %vm67, %v2190, 0.0
    %2197 = vadd.xlane.f32.xlu0 %v2196
    %v2198 = vpop.xlane.xlu0 %2197
    %v2199 = vmul.f32 %v2195, %v74
    %v2200 = vmul.f32 %v2198, %v74
    %v2201 = vsub.f32 %v2189, %v2199
    %v2202 = vsub.f32 %v2190, %v2200
    %v2203 = vmul.f32 %v2201, %v2201
    %v2204 = vmul.f32 %v2202, %v2202
    %v2205 = vsel %vm67, %v2203, 0.0
    %2206 = vadd.xlane.f32.xlu0 %v2205
    %v2207 = vpop.xlane.xlu0 %2206
    %v2208 = vsel %vm67, %v2204, 0.0
    %2209 = vadd.xlane.f32.xlu0 %v2208
    %v2210 = vpop.xlane.xlu0 %2209
    %v2211 = vmul.f32 %v2207, %v74
    %v2212 = vmul.f32 %v2210, %v74
    %v2213 = vadd.f32 %v2211, 1e-05
    %v2214 = vadd.f32 %v2212, 1e-05
    %v2215 = vrsqrt.pop %v2213
    %v2216 = vrsqrt.pop %v2214
    %v2217 = vmul.f32 %v2201, %v2215
    %v2218 = vmul.f32 %v2202, %v2216
    %v2220 = vlaneseq
    %v2221 = vshrl.u32 %v2220, 7
    %v2222 = vsub.s32 0, %v2221
    %v2223 = vrot.slane %v2191, %v2222
    %v2225 = vmul.f32 %v2217, %v2223
    %v2226 = vmul.f32 %v2218, %v2223
    %v2228 = vlaneseq
    %v2229 = vshrl.u32 %v2228, 7
    %v2230 = vsub.s32 0, %v2229
    %v2231 = vrot.slane %v2192, %v2230
    %v2233 = vadd.f32 %v2225, %v2231
    %v2234 = vadd.f32 %v2226, %v2231
    %v2235 = vpack.c.bf16 %v2234, %v2233
    %v2236 = vld [vmem:[%s13] sm:$0xf]
    %v2237 = vld [vmem:[%s13 + $0x4] sm:$0xf]
    %v2238 = vld [vmem:[%s13 + $0x8] sm:$0xf]
    %v2239 = vld [vmem:[%s13 + $0xc] sm:$0xf]
    %v2240 = vld [vmem:[%s14] sm:$0x1]
    %v2242 = vlaneseq
    %v2243 = vshrl.u32 %v2242, 7
    %v2244 = vsub.s32 0, %v2243
    %v2245 = vrot.slane %v2240, %v2244
    %v2251 = vunpack.c.l.b16 %v2236
    %v2252 = vunpack.c.l.b16 %v2237
    %v2253 = vunpack.c.l.b16 %v2238
    %v2254 = vunpack.c.l.b16 %v2239
    %v2255 = vpack.c.b16 %v2252, %v2251
    %v2256 = vpack.c.b16 %v2254, %v2253
    %v2260 = vsel %vm67, %v2235, 0
    %2262 = vmatprep.subr.bf16.mxu0 0
    %2263 = vmatpush1.bf16.msra.mxu0 %v2255
    %2264 = vmatprep.subr.bf16.mxu0 0
    %2265 = vmatpush1.bf16.msra.mxu0 %v2256
    %2266 = vmatprep.subr.bf16.mxu0 0
    %2267 = vmatpush1.bf16.msra.mxu0 0
    %2268 = vmatprep.subr.bf16.mxu0 0
    %2269 = vmatpush1.bf16.msra.mxu0 0
    %2270 = vmatprep.subr.bf16.mxu0 0
    %2271 = vmatpush1.bf16.msra.mxu0 0
    %2272 = vmatprep.subr.bf16.mxu0 0
    %2273 = vmatpush1.bf16.msra.mxu0 0
    %2274 = vmatprep.subr.bf16.mxu0 0
    %2275 = vmatpush1.bf16.msra.mxu0 0
    %2276 = vmatprep.subr.bf16.mxu0 0
    %2277 = vmatpush1.bf16.msra.mxu0 0
    %2278 = vmatprep.subr.bf16.mxu0 0
    %2279 = vmatpush1.bf16.msra.mxu0 0
    %2280 = vmatprep.subr.bf16.mxu0 0
    %2281 = vmatpush1.bf16.msra.mxu0 0
    %2282 = vmatprep.subr.bf16.mxu0 0
    %2283 = vmatpush1.bf16.msra.mxu0 0
    %2284 = vmatprep.subr.bf16.mxu0 0
    %2285 = vmatpush1.bf16.msra.mxu0 0
    %2286 = vmatprep.subr.bf16.mxu0 0
    %2287 = vmatpush1.bf16.msra.mxu0 0
    %2288 = vmatprep.subr.bf16.mxu0 0
    %2289 = vmatpush1.bf16.msra.mxu0 0
    %2290 = vmatprep.subr.bf16.mxu0 0
    %2291 = vmatpush1.bf16.msra.mxu0 0
    %2292 = vmatprep.subr.bf16.mxu0 0
    %2293 = vmatpush1.bf16.msra.mxu0 0
    %2294 = vmatprep.mubr.bf16.mxu0 0
    %2295 = vmatmul.mubr.bf16.gmra.mrb[0].mxu0 %v2260
    %v2296 = vpop.f32.mrb[0].mxu0
    %v2297 = vadd.f32 %v2245, %v2296
    %v2298 = vpop.f32.mrb[0].mxu0
    %v2299 = vpop.f32.mrb[0].mxu0
    %v2300 = vadd.f32 %v2245, %v2299
    %v2301 = vpop.f32.mrb[0].mxu0
    %2302 = vdwg.mxu0
    %v2303 = vmax.f32 %v2297, 0.0
    %v2304 = vmax.f32 %v2300, 0.0
    %v2305 = vpack.c.bf16 %v2304, %v2303
    %v2306 = vld [vmem:[%s15] sm:$0xf]
    %v2307 = vld [vmem:[%s15 + $0x4] sm:$0xf]
    %v2308 = vld [vmem:[%s15 + $0x8] sm:$0xf]
    %v2309 = vld [vmem:[%s15 + $0xc] sm:$0xf]
    %v2310 = vld [vmem:[%s16] sm:$0x1]
    %v2312 = vlaneseq
    %v2313 = vshrl.u32 %v2312, 7
    %v2314 = vsub.s32 0, %v2313
    %v2315 = vrot.slane %v2310, %v2314
    %v2321 = vunpack.c.l.b16 %v2306
    %v2322 = vunpack.c.l.b16 %v2307
    %v2323 = vunpack.c.l.b16 %v2308
    %v2324 = vunpack.c.l.b16 %v2309
    %v2325 = vpack.c.b16 %v2322, %v2321
    %v2326 = vpack.c.b16 %v2324, %v2323
    %v2330 = vsel %vm67, %v2305, 0
    %2332 = vmatprep.subr.bf16.mxu0 0
    %2333 = vmatpush1.bf16.msra.mxu0 %v2325
    %2334 = vmatprep.subr.bf16.mxu0 0
    %2335 = vmatpush1.bf16.msra.mxu0 %v2326
    %2336 = vmatprep.subr.bf16.mxu0 0
    %2337 = vmatpush1.bf16.msra.mxu0 0
    %2338 = vmatprep.subr.bf16.mxu0 0
    %2339 = vmatpush1.bf16.msra.mxu0 0
    %2340 = vmatprep.subr.bf16.mxu0 0
    %2341 = vmatpush1.bf16.msra.mxu0 0
    %2342 = vmatprep.subr.bf16.mxu0 0
    %2343 = vmatpush1.bf16.msra.mxu0 0
    %2344 = vmatprep.subr.bf16.mxu0 0
    %2345 = vmatpush1.bf16.msra.mxu0 0
    %2346 = vmatprep.subr.bf16.mxu0 0
    %2347 = vmatpush1.bf16.msra.mxu0 0
    %2348 = vmatprep.subr.bf16.mxu0 0
    %2349 = vmatpush1.bf16.msra.mxu0 0
    %2350 = vmatprep.subr.bf16.mxu0 0
    %2351 = vmatpush1.bf16.msra.mxu0 0
    %2352 = vmatprep.subr.bf16.mxu0 0
    %2353 = vmatpush1.bf16.msra.mxu0 0
    %2354 = vmatprep.subr.bf16.mxu0 0
    %2355 = vmatpush1.bf16.msra.mxu0 0
    %2356 = vmatprep.subr.bf16.mxu0 0
    %2357 = vmatpush1.bf16.msra.mxu0 0
    %2358 = vmatprep.subr.bf16.mxu0 0
    %2359 = vmatpush1.bf16.msra.mxu0 0
    %2360 = vmatprep.subr.bf16.mxu0 0
    %2361 = vmatpush1.bf16.msra.mxu0 0
    %2362 = vmatprep.subr.bf16.mxu0 0
    %2363 = vmatpush1.bf16.msra.mxu0 0
    %2364 = vmatprep.mubr.bf16.mxu0 0
    %2365 = vmatmul.mubr.bf16.gmra.mrb[0].mxu0 %v2330
    %v2366 = vpop.f32.mrb[0].mxu0
    %v2367 = vadd.f32 %v2315, %v2366
    %v2368 = vpop.f32.mrb[0].mxu0
    %v2369 = vpop.f32.mrb[0].mxu0
    %v2370 = vadd.f32 %v2315, %v2369
    %v2371 = vpop.f32.mrb[0].mxu0
    %2372 = vdwg.mxu0
    %v2373 = vadd.f32 %v2367, %v58
    %v2374 = vadd.f32 %v2370, %v59
    %2375 = vst.msk [vmem:[#allocation2] sm:$0xff] %vm67, %v2373
    %2376 = vst.msk [vmem:[#allocation2 + $0x8] sm:$0xff] %vm67, %v2374
    // Predicated region
    $region70: #{tpu_custom_call.1} parent=1 // pred_check
      _
    $region71: #{tpu_custom_call.1} parent=1 // pred_check_branch
      %2378 = sbr.rel (0) target = $region73
    $region72: #{tpu_custom_call.1} parent=1 // pred_region
      %s2380 = ssub.s32 256, 256
      %2381 = vsyncadd [#allocation3], %s2380
      %s2382 = sshll.u32 [#allocation2], 4
      %s2383 = int_to_ptr.vmem [resolvable:$true] %s2382
      %2388 = dma.vmem_to_hbm [thread:$0]  %s2383, 256, %s17, [#allocation3], 128, 128, 8
    $region73: #{tpu_custom_call.1} parent=1 // pred_fallthru
      _
    // Predicated region
    $region74: #{tpu_custom_call.1} parent=1 // pred_check
      _
    $region75: #{tpu_custom_call.1} parent=1 // pred_check_branch
      %2390 = sbr.rel (0) target = $region77
    $region76: #{tpu_custom_call.1} parent=1 // pred_region
      %2391 = dma.done [#allocation3], 256
    $region77: #{tpu_custom_call.1} parent=1 // pred_fallthru
      _
    %2392 = vsyncpa [#allocation3], 1

</llo_original>
